<compile_context>
chip_gen: v6e
topology: v6e:2x2x1
jax: 0.10.0
libtpu: 0.0.40
codegen_flags: <defaults>
</compile_context>

<pallas_src>
import jax
import jax.numpy as jnp
from jax import lax
from jax.experimental import pallas as pl
from jax.experimental.pallas import tpu as pltpu


def _down_kernel(x_ref, w1_ref, s1_ref, b1_ref, w2_ref, s2_ref, b2_ref,
                 o_ref, pad1, pad2, col1, col2):
    # Block shapes:
    #   x_ref  : (1, Ho, 2, Wo, 2*Cin)   NHWC input, H and W split into pool pairs
    #   w*_ref : (9*Cin_, Cout_)         im2col-ordered conv weights
    #   s*/b*  : (1, C)                  folded BatchNorm scale / shift
    #   o_ref  : (1, Ho, Wo, Cout)       unpadded output slab
    #   pad1   : VMEM (Ho+2, Wo+2, Cin)  zero-halo pooled input
    #   pad2   : VMEM (Ho+2, Wo+2, Cmid) zero-halo conv1 output
    #   col1/2 : VMEM (Ho*Wo, 9*Cin_)    im2col LHS slabs
    _, Ho, _, Wo, c2 = x_ref.shape
    cin = c2 // 2
    cmid = w1_ref.shape[-1]
    cout = w2_ref.shape[-1]
    howo = Ho * Wo

    # Zero the halo'd scratch buffers once; interiors are fully rewritten
    # every grid step and the 1-px border is never written again.
    @pl.when(pl.program_id(0) == 0)
    def _():
        pad1[...] = jnp.zeros(pad1.shape, pad1.dtype)
        pad2[...] = jnp.zeros(pad2.shape, pad2.dtype)

    # ---- MaxPool2d(2): the four window corners are contiguous value slices ----
    x = x_ref[...]                                             # (1, Ho, 2, Wo, 2*Cin)
    rmax = jnp.maximum(x[0, :, 0, :, :], x[0, :, 1, :, :])     # rows paired
    pooled = jnp.maximum(rmax[:, :, :cin], rmax[:, :, cin:])   # cols paired -> (Ho, Wo, Cin)
    pad1[1:Ho + 1, 1:Wo + 1, :] = pooled.astype(pad1.dtype)

    # ---- 3x3 SAME conv as a single im2col matmul (K = 9*c), then BN + ReLU ----
    def conv_bn_relu(pad_ref, col_ref, w_ref, s_ref, b_ref):
        c = pad_ref.shape[-1]
        p = pad_ref[...]                                       # (Ho+2, Wo+2, c)
        for k in range(9):                                     # static unroll
            ky, kx = k // 3, k % 3
            col_ref[:, k * c:(k + 1) * c] = (
                p[ky:ky + Ho, kx:kx + Wo, :].reshape(howo, c))
        y = jnp.dot(col_ref[...], w_ref[...],
                    preferred_element_type=jnp.float32)        # (howo, cout_)
        return jnp.maximum(y * s_ref[...] + b_ref[...], 0.0)

    y1 = conv_bn_relu(pad1, col1, w1_ref, s1_ref, b1_ref)      # (howo, cmid)
    pad2[1:Ho + 1, 1:Wo + 1, :] = y1.reshape(Ho, Wo, cmid).astype(pad2.dtype)

    y2 = conv_bn_relu(pad2, col2, w2_ref, s2_ref, b2_ref)      # (howo, cout)
    o_ref[...] = y2.reshape(1, Ho, Wo, cout).astype(o_ref.dtype)


def down_forward(x_nchw, params):
    """Down(in_ch, out_ch) forward: NCHW in, NCHW out (eval-mode BN)."""
    w1, s1, b1, w2, s2, b2 = params
    N, Cin, H, W = x_nchw.shape
    assert H % 2 == 0 and W % 2 == 0
    Ho, Wo = H // 2, W // 2
    Cmid = w1.shape[-1]
    Cout = w2.shape[-1]

    # NHWC; the (Ho, 2, Wo, 2*Cin) split is a free contiguous reshape that
    # exposes both 2x2 pool-window axes without any strided HBM copies and
    # without padding the channel dim in HBM.
    x = jnp.transpose(x_nchw, (0, 2, 3, 1))
    x_r = x.reshape(N, Ho, 2, Wo, 2 * Cin)

    # HWIO conv weights -> im2col layout (9*Cin, Cout); row index is
    # (ky*3 + kx)*Cin + ci, matching the column order built in-kernel.
    w1r = w1.reshape(9 * Cin, Cmid)
    w2r = w2.reshape(9 * Cmid, Cout)

    out = pl.pallas_call(
        _down_kernel,
        out_shape=jax.ShapeDtypeStruct((N, Ho, Wo, Cout), x.dtype),
        grid=(N,),
        in_specs=[
            pl.BlockSpec((1, Ho, 2, Wo, 2 * Cin), lambda n: (n, 0, 0, 0, 0)),
            pl.BlockSpec((9 * Cin, Cmid), lambda n: (0, 0)),
            pl.BlockSpec((1, Cmid), lambda n: (0, 0)),
            pl.BlockSpec((1, Cmid), lambda n: (0, 0)),
            pl.BlockSpec((9 * Cmid, Cout), lambda n: (0, 0)),
            pl.BlockSpec((1, Cout), lambda n: (0, 0)),
            pl.BlockSpec((1, Cout), lambda n: (0, 0)),
        ],
        out_specs=pl.BlockSpec((1, Ho, Wo, Cout), lambda n: (n, 0, 0, 0)),
        scratch_shapes=[
            pltpu.VMEM((Ho + 2, Wo + 2, Cin), jnp.float32),
            pltpu.VMEM((Ho + 2, Wo + 2, Cmid), jnp.float32),
            pltpu.VMEM((Ho * Wo, 9 * Cin), jnp.float32),
            pltpu.VMEM((Ho * Wo, 9 * Cmid), jnp.float32),
        ],
        compiler_params=pltpu.CompilerParams(
            dimension_semantics=("parallel",),
            vmem_limit_bytes=64 * 1024 * 1024),
    )(x_r, w1r, s1, b1, w2r, s2, b2)

    return jnp.transpose(out, (0, 3, 1, 2))      # -> NCHW


def make_params(key, in_ch, out_ch, eps=1e-5):
    """Deterministic synthetic parameters; BatchNorm folded to scale/shift."""
    ks = jax.random.split(key, 10)

    def bn_fold(kg, kb, km, kv, c):
        gamma = 1.0 + 0.1 * jax.random.normal(kg, (c,), jnp.float32)
        beta = 0.1 * jax.random.normal(kb, (c,), jnp.float32)
        mean = 0.05 * jax.random.normal(km, (c,), jnp.float32)
        var = jax.random.uniform(kv, (c,), jnp.float32, 0.5, 1.5)
        scale = gamma / jnp.sqrt(var + eps)
        shift = beta - mean * scale
        return scale.reshape(1, c), shift.reshape(1, c)

    w1 = 0.1 * jax.random.normal(ks[0], (3, 3, in_ch, out_ch), jnp.float32)
    s1, b1 = bn_fold(ks[1], ks[2], ks[3], ks[4], out_ch)
    w2 = 0.1 * jax.random.normal(ks[5], (3, 3, out_ch, out_ch), jnp.float32)
    s2, b2 = bn_fold(ks[6], ks[7], ks[8], ks[9], out_ch)
    return (w1, s1, b1, w2, s2, b2)


def ref_forward(x_nchw, params):
    """Pure-JAX reference (same eval-mode BN folding)."""
    w1, s1, b1, w2, s2, b2 = params
    x = jnp.transpose(x_nchw, (0, 2, 3, 1))
    x = lax.reduce_window(x, -jnp.inf, lax.max,
                          (1, 2, 2, 1), (1, 2, 2, 1), "VALID")
    dn = ("NHWC", "HWIO", "NHWC")
    y = lax.conv_general_dilated(x, w1, (1, 1), "SAME", dimension_numbers=dn)
    y = jnp.maximum(y * s1.reshape(1, 1, 1, -1) + b1.reshape(1, 1, 1, -1), 0.0)
    y = lax.conv_general_dilated(y, w2, (1, 1), "SAME", dimension_numbers=dn)
    y = jnp.maximum(y * s2.reshape(1, 1, 1, -1) + b2.reshape(1, 1, 1, -1), 0.0)
    return jnp.transpose(y, (0, 3, 1, 2))


if __name__ == "__main__":
    key = jax.random.PRNGKey(0)
    k_x, k_p = jax.random.split(key)

    N, Cin, H, W = 2, 4, 16, 16
    Cout = 8
    x = jax.random.normal(k_x, (N, Cin, H, W), jnp.float32)
    params = make_params(k_p, Cin, Cout)

    out = jax.block_until_ready(down_forward(x, params))

    expected = jax.block_until_ready(ref_forward(x, params))
    assert out.shape == (N, Cout, H // 2, W // 2), out.shape
    assert jnp.allclose(out, expected, rtol=1e-4, atol=1e-5), (
        float(jnp.max(jnp.abs(out - expected))))

    print("KERNEL_OK")
</pallas_src>

<mosaic_0001>
module attributes {stable_mosaic.version = 11 : i64} {
  func.func @_down_kernel(%arg0: i32, %arg1: memref<1x8x2x8x8xf32, #tpu.memory_space<vmem>>, %arg2: memref<36x8xf32, #tpu.memory_space<vmem>>, %arg3: memref<1x8xf32, #tpu.memory_space<vmem>>, %arg4: memref<1x8xf32, #tpu.memory_space<vmem>>, %arg5: memref<72x8xf32, #tpu.memory_space<vmem>>, %arg6: memref<1x8xf32, #tpu.memory_space<vmem>>, %arg7: memref<1x8xf32, #tpu.memory_space<vmem>>, %arg8: memref<1x8x8x8xf32, #tpu.memory_space<vmem>>, %arg9: memref<10x10x4xf32, #tpu.memory_space<vmem>>, %arg10: memref<10x10x8xf32, #tpu.memory_space<vmem>>, %arg11: memref<64x36xf32, #tpu.memory_space<vmem>>, %arg12: memref<64x72xf32, #tpu.memory_space<vmem>>) attributes {dimension_semantics = [#tpu.dimension_semantics<parallel>], iteration_bounds = array<i64: 2>, scalar_prefetch = 0 : i64, scratch_operands = 4 : i64, tpu.core_type = #tpu.core_type<tc>, window_params = [{transform_indices = @transform_0, window_bounds = array<i64: 1, 8, 2, 8, 8>}, {pipeline_mode = #tpu.pipeline_mode<synchronous>, transform_indices = @transform_1, window_bounds = array<i64: 36, 8>}, {pipeline_mode = #tpu.pipeline_mode<synchronous>, transform_indices = @transform_2, window_bounds = array<i64: 1, 8>}, {pipeline_mode = #tpu.pipeline_mode<synchronous>, transform_indices = @transform_3, window_bounds = array<i64: 1, 8>}, {pipeline_mode = #tpu.pipeline_mode<synchronous>, transform_indices = @transform_4, window_bounds = array<i64: 72, 8>}, {pipeline_mode = #tpu.pipeline_mode<synchronous>, transform_indices = @transform_5, window_bounds = array<i64: 1, 8>}, {pipeline_mode = #tpu.pipeline_mode<synchronous>, transform_indices = @transform_6, window_bounds = array<i64: 1, 8>}, {transform_indices = @transform_7, window_bounds = array<i64: 1, 8, 8, 8>}]} {
    %c0_i32 = arith.constant 0 : i32
    %0 = arith.cmpi eq, %arg0, %c0_i32 : i32
    %1 = arith.extui %0 : i1 to i32
    %c0_i32_0 = arith.constant 0 : i32
    %2 = arith.cmpi ne, %1, %c0_i32_0 : i32
    scf.if %2 {
      %cst_63 = arith.constant 0.000000e+00 : f32
      %95 = vector.broadcast %cst_63 : f32 to vector<10x10x4xf32>
      %c0_64 = arith.constant 0 : index
      %c0_65 = arith.constant 0 : index
      %c0_66 = arith.constant 0 : index
      %96 = vector.load %arg9[%c0_64, %c0_65, %c0_66] : memref<10x10x4xf32, #tpu.memory_space<vmem>>, vector<10x10x4xf32>
      tpu.vector_store %arg9[%c0_64, %c0_65, %c0_66], %95 {strides = array<i32>} : memref<10x10x4xf32, #tpu.memory_space<vmem>>, vector<10x10x4xf32>,
      %cst_67 = arith.constant 0.000000e+00 : f32
      %97 = vector.broadcast %cst_67 : f32 to vector<10x10x8xf32>
      %c0_68 = arith.constant 0 : index
      %c0_69 = arith.constant 0 : index
      %c0_70 = arith.constant 0 : index
      %98 = vector.load %arg10[%c0_68, %c0_69, %c0_70] : memref<10x10x8xf32, #tpu.memory_space<vmem>>, vector<10x10x8xf32>
      tpu.vector_store %arg10[%c0_68, %c0_69, %c0_70], %97 {strides = array<i32>} : memref<10x10x8xf32, #tpu.memory_space<vmem>>, vector<10x10x8xf32>,
    } else {
    }
    %c0 = arith.constant 0 : index
    %c0_1 = arith.constant 0 : index
    %c0_2 = arith.constant 0 : index
    %c0_3 = arith.constant 0 : index
    %c0_4 = arith.constant 0 : index
    %3 = vector.load %arg1[%c0, %c0_1, %c0_2, %c0_3, %c0_4] : memref<1x8x2x8x8xf32, #tpu.memory_space<vmem>>, vector<1x8x2x8x8xf32>
    %4 = vector.extract_strided_slice %3 {offsets = [0, 0, 0, 0, 0], sizes = [1, 8, 1, 8, 8], strides = [1, 1, 1, 1, 1]} : vector<1x8x2x8x8xf32> to vector<1x8x1x8x8xf32>
    %5 = vector.shape_cast %4 : vector<1x8x1x8x8xf32> to vector<8x8x8xf32>
    %6 = vector.extract_strided_slice %3 {offsets = [0, 0, 1, 0, 0], sizes = [1, 8, 1, 8, 8], strides = [1, 1, 1, 1, 1]} : vector<1x8x2x8x8xf32> to vector<1x8x1x8x8xf32>
    %7 = vector.shape_cast %6 : vector<1x8x1x8x8xf32> to vector<8x8x8xf32>
    %8 = arith.maximumf %5, %7 : vector<8x8x8xf32>
    %9 = vector.extract_strided_slice %8 {offsets = [0, 0, 0], sizes = [8, 8, 4], strides = [1, 1, 1]} : vector<8x8x8xf32> to vector<8x8x4xf32>
    %10 = vector.extract_strided_slice %8 {offsets = [0, 0, 4], sizes = [8, 8, 4], strides = [1, 1, 1]} : vector<8x8x8xf32> to vector<8x8x4xf32>
    %11 = arith.maximumf %9, %10 : vector<8x8x4xf32>
    %c1 = arith.constant 1 : index
    %c1_5 = arith.constant 1 : index
    %c0_6 = arith.constant 0 : index
    %12 = vector.load %arg9[%c1, %c1_5, %c0_6] : memref<10x10x4xf32, #tpu.memory_space<vmem>>, vector<8x8x4xf32>
    tpu.vector_store %arg9[%c1, %c1_5, %c0_6], %11 {strides = array<i32>} : memref<10x10x4xf32, #tpu.memory_space<vmem>>, vector<8x8x4xf32>,
    %c0_7 = arith.constant 0 : index
    %c0_8 = arith.constant 0 : index
    %c0_9 = arith.constant 0 : index
    %13 = vector.load %arg9[%c0_7, %c0_8, %c0_9] : memref<10x10x4xf32, #tpu.memory_space<vmem>>, vector<10x10x4xf32>
    %14 = vector.extract_strided_slice %13 {offsets = [0, 0, 0], sizes = [8, 8, 4], strides = [1, 1, 1]} : vector<10x10x4xf32> to vector<8x8x4xf32>
    %15 = vector.shape_cast %14 : vector<8x8x4xf32> to vector<64x4xf32>
    %c0_10 = arith.constant 0 : index
    %c0_11 = arith.constant 0 : index
    %16 = vector.load %arg11[%c0_10, %c0_11] : memref<64x36xf32, #tpu.memory_space<vmem>>, vector<64x4xf32>
    tpu.vector_store %arg11[%c0_10, %c0_11], %15 {strides = array<i32>} : memref<64x36xf32, #tpu.memory_space<vmem>>, vector<64x4xf32>,
    %17 = vector.extract_strided_slice %13 {offsets = [0, 1, 0], sizes = [8, 8, 4], strides = [1, 1, 1]} : vector<10x10x4xf32> to vector<8x8x4xf32>
    %18 = vector.shape_cast %17 : vector<8x8x4xf32> to vector<64x4xf32>
    %c0_12 = arith.constant 0 : index
    %c4 = arith.constant 4 : index
    %19 = vector.load %arg11[%c0_12, %c4] : memref<64x36xf32, #tpu.memory_space<vmem>>, vector<64x4xf32>
    tpu.vector_store %arg11[%c0_12, %c4], %18 {strides = array<i32>} : memref<64x36xf32, #tpu.memory_space<vmem>>, vector<64x4xf32>,
    %20 = vector.extract_strided_slice %13 {offsets = [0, 2, 0], sizes = [8, 8, 4], strides = [1, 1, 1]} : vector<10x10x4xf32> to vector<8x8x4xf32>
    %21 = vector.shape_cast %20 : vector<8x8x4xf32> to vector<64x4xf32>
    %c0_13 = arith.constant 0 : index
    %c8 = arith.constant 8 : index
    %22 = vector.load %arg11[%c0_13, %c8] : memref<64x36xf32, #tpu.memory_space<vmem>>, vector<64x4xf32>
    tpu.vector_store %arg11[%c0_13, %c8], %21 {strides = array<i32>} : memref<64x36xf32, #tpu.memory_space<vmem>>, vector<64x4xf32>,
    %23 = vector.extract_strided_slice %13 {offsets = [1, 0, 0], sizes = [8, 8, 4], strides = [1, 1, 1]} : vector<10x10x4xf32> to vector<8x8x4xf32>
    %24 = vector.shape_cast %23 : vector<8x8x4xf32> to vector<64x4xf32>
    %c0_14 = arith.constant 0 : index
    %c12 = arith.constant 12 : index
    %25 = vector.load %arg11[%c0_14, %c12] : memref<64x36xf32, #tpu.memory_space<vmem>>, vector<64x4xf32>
    tpu.vector_store %arg11[%c0_14, %c12], %24 {strides = array<i32>} : memref<64x36xf32, #tpu.memory_space<vmem>>, vector<64x4xf32>,
    %26 = vector.extract_strided_slice %13 {offsets = [1, 1, 0], sizes = [8, 8, 4], strides = [1, 1, 1]} : vector<10x10x4xf32> to vector<8x8x4xf32>
    %27 = vector.shape_cast %26 : vector<8x8x4xf32> to vector<64x4xf32>
    %c0_15 = arith.constant 0 : index
    %c16 = arith.constant 16 : index
    %28 = vector.load %arg11[%c0_15, %c16] : memref<64x36xf32, #tpu.memory_space<vmem>>, vector<64x4xf32>
    tpu.vector_store %arg11[%c0_15, %c16], %27 {strides = array<i32>} : memref<64x36xf32, #tpu.memory_space<vmem>>, vector<64x4xf32>,
    %29 = vector.extract_strided_slice %13 {offsets = [1, 2, 0], sizes = [8, 8, 4], strides = [1, 1, 1]} : vector<10x10x4xf32> to vector<8x8x4xf32>
    %30 = vector.shape_cast %29 : vector<8x8x4xf32> to vector<64x4xf32>
    %c0_16 = arith.constant 0 : index
    %c20 = arith.constant 20 : index
    %31 = vector.load %arg11[%c0_16, %c20] : memref<64x36xf32, #tpu.memory_space<vmem>>, vector<64x4xf32>
    tpu.vector_store %arg11[%c0_16, %c20], %30 {strides = array<i32>} : memref<64x36xf32, #tpu.memory_space<vmem>>, vector<64x4xf32>,
    %32 = vector.extract_strided_slice %13 {offsets = [2, 0, 0], sizes = [8, 8, 4], strides = [1, 1, 1]} : vector<10x10x4xf32> to vector<8x8x4xf32>
    %33 = vector.shape_cast %32 : vector<8x8x4xf32> to vector<64x4xf32>
    %c0_17 = arith.constant 0 : index
    %c24 = arith.constant 24 : index
    %34 = vector.load %arg11[%c0_17, %c24] : memref<64x36xf32, #tpu.memory_space<vmem>>, vector<64x4xf32>
    tpu.vector_store %arg11[%c0_17, %c24], %33 {strides = array<i32>} : memref<64x36xf32, #tpu.memory_space<vmem>>, vector<64x4xf32>,
    %35 = vector.extract_strided_slice %13 {offsets = [2, 1, 0], sizes = [8, 8, 4], strides = [1, 1, 1]} : vector<10x10x4xf32> to vector<8x8x4xf32>
    %36 = vector.shape_cast %35 : vector<8x8x4xf32> to vector<64x4xf32>
    %c0_18 = arith.constant 0 : index
    %c28 = arith.constant 28 : index
    %37 = vector.load %arg11[%c0_18, %c28] : memref<64x36xf32, #tpu.memory_space<vmem>>, vector<64x4xf32>
    tpu.vector_store %arg11[%c0_18, %c28], %36 {strides = array<i32>} : memref<64x36xf32, #tpu.memory_space<vmem>>, vector<64x4xf32>,
    %38 = vector.extract_strided_slice %13 {offsets = [2, 2, 0], sizes = [8, 8, 4], strides = [1, 1, 1]} : vector<10x10x4xf32> to vector<8x8x4xf32>
    %39 = vector.shape_cast %38 : vector<8x8x4xf32> to vector<64x4xf32>
    %c0_19 = arith.constant 0 : index
    %c32 = arith.constant 32 : index
    %40 = vector.load %arg11[%c0_19, %c32] : memref<64x36xf32, #tpu.memory_space<vmem>>, vector<64x4xf32>
    tpu.vector_store %arg11[%c0_19, %c32], %39 {strides = array<i32>} : memref<64x36xf32, #tpu.memory_space<vmem>>, vector<64x4xf32>,
    %c0_20 = arith.constant 0 : index
    %c0_21 = arith.constant 0 : index
    %41 = vector.load %arg11[%c0_20, %c0_21] : memref<64x36xf32, #tpu.memory_space<vmem>>, vector<64x36xf32>
    %c0_22 = arith.constant 0 : index
    %c0_23 = arith.constant 0 : index
    %42 = vector.load %arg2[%c0_22, %c0_23] : memref<36x8xf32, #tpu.memory_space<vmem>>, vector<36x8xf32>
    %cst = arith.constant dense<0.000000e+00> : vector<64x8xf32>
    %43 = tpu.matmul %41, %42, %cst {dimension_numbers = #tpu.dot_dimension_numbers<[1], [0], [0], [1], [0, 0, 1, 1], [], []>} : vector<64x36xf32>, vector<36x8xf32>, vector<64x8xf32> -> vector<64x8xf32>
    %c0_24 = arith.constant 0 : index
    %c0_25 = arith.constant 0 : index
    %44 = vector.load %arg3[%c0_24, %c0_25] : memref<1x8xf32, #tpu.memory_space<vmem>>, vector<1x8xf32>
    %45 = vector.broadcast %44 : vector<1x8xf32> to vector<64x8xf32>
    %46 = arith.mulf %43, %45 : vector<64x8xf32>
    %c0_26 = arith.constant 0 : index
    %c0_27 = arith.constant 0 : index
    %47 = vector.load %arg4[%c0_26, %c0_27] : memref<1x8xf32, #tpu.memory_space<vmem>>, vector<1x8xf32>
    %48 = vector.broadcast %47 : vector<1x8xf32> to vector<64x8xf32>
    %49 = arith.addf %46, %48 : vector<64x8xf32>
    %cst_28 = arith.constant 0.000000e+00 : f32
    %50 = vector.broadcast %cst_28 : f32 to vector<64x8xf32>
    %51 = arith.maximumf %49, %50 : vector<64x8xf32>
    %52 = vector.shape_cast %51 : vector<64x8xf32> to vector<8x8x8xf32>
    %c1_29 = arith.constant 1 : index
    %c1_30 = arith.constant 1 : index
    %c0_31 = arith.constant 0 : index
    %53 = vector.load %arg10[%c1_29, %c1_30, %c0_31] : memref<10x10x8xf32, #tpu.memory_space<vmem>>, vector<8x8x8xf32>
    tpu.vector_store %arg10[%c1_29, %c1_30, %c0_31], %52 {strides = array<i32>} : memref<10x10x8xf32, #tpu.memory_space<vmem>>, vector<8x8x8xf32>,
    %c0_32 = arith.constant 0 : index
    %c0_33 = arith.constant 0 : index
    %c0_34 = arith.constant 0 : index
    %54 = vector.load %arg10[%c0_32, %c0_33, %c0_34] : memref<10x10x8xf32, #tpu.memory_space<vmem>>, vector<10x10x8xf32>
    %55 = vector.extract_strided_slice %54 {offsets = [0, 0, 0], sizes = [8, 8, 8], strides = [1, 1, 1]} : vector<10x10x8xf32> to vector<8x8x8xf32>
    %56 = vector.shape_cast %55 : vector<8x8x8xf32> to vector<64x8xf32>
    %c0_35 = arith.constant 0 : index
    %c0_36 = arith.constant 0 : index
    %57 = vector.load %arg12[%c0_35, %c0_36] : memref<64x72xf32, #tpu.memory_space<vmem>>, vector<64x8xf32>
    tpu.vector_store %arg12[%c0_35, %c0_36], %56 {strides = array<i32>} : memref<64x72xf32, #tpu.memory_space<vmem>>, vector<64x8xf32>,
    %58 = vector.extract_strided_slice %54 {offsets = [0, 1, 0], sizes = [8, 8, 8], strides = [1, 1, 1]} : vector<10x10x8xf32> to vector<8x8x8xf32>
    %59 = vector.shape_cast %58 : vector<8x8x8xf32> to vector<64x8xf32>
    %c0_37 = arith.constant 0 : index
    %c8_38 = arith.constant 8 : index
    %60 = vector.load %arg12[%c0_37, %c8_38] : memref<64x72xf32, #tpu.memory_space<vmem>>, vector<64x8xf32>
    tpu.vector_store %arg12[%c0_37, %c8_38], %59 {strides = array<i32>} : memref<64x72xf32, #tpu.memory_space<vmem>>, vector<64x8xf32>,
    %61 = vector.extract_strided_slice %54 {offsets = [0, 2, 0], sizes = [8, 8, 8], strides = [1, 1, 1]} : vector<10x10x8xf32> to vector<8x8x8xf32>
    %62 = vector.shape_cast %61 : vector<8x8x8xf32> to vector<64x8xf32>
    %c0_39 = arith.constant 0 : index
    %c16_40 = arith.constant 16 : index
    %63 = vector.load %arg12[%c0_39, %c16_40] : memref<64x72xf32, #tpu.memory_space<vmem>>, vector<64x8xf32>
    tpu.vector_store %arg12[%c0_39, %c16_40], %62 {strides = array<i32>} : memref<64x72xf32, #tpu.memory_space<vmem>>, vector<64x8xf32>,
    %64 = vector.extract_strided_slice %54 {offsets = [1, 0, 0], sizes = [8, 8, 8], strides = [1, 1, 1]} : vector<10x10x8xf32> to vector<8x8x8xf32>
    %65 = vector.shape_cast %64 : vector<8x8x8xf32> to vector<64x8xf32>
    %c0_41 = arith.constant 0 : index
    %c24_42 = arith.constant 24 : index
    %66 = vector.load %arg12[%c0_41, %c24_42] : memref<64x72xf32, #tpu.memory_space<vmem>>, vector<64x8xf32>
    tpu.vector_store %arg12[%c0_41, %c24_42], %65 {strides = array<i32>} : memref<64x72xf32, #tpu.memory_space<vmem>>, vector<64x8xf32>,
    %67 = vector.extract_strided_slice %54 {offsets = [1, 1, 0], sizes = [8, 8, 8], strides = [1, 1, 1]} : vector<10x10x8xf32> to vector<8x8x8xf32>
    %68 = vector.shape_cast %67 : vector<8x8x8xf32> to vector<64x8xf32>
    %c0_43 = arith.constant 0 : index
    %c32_44 = arith.constant 32 : index
    %69 = vector.load %arg12[%c0_43, %c32_44] : memref<64x72xf32, #tpu.memory_space<vmem>>, vector<64x8xf32>
    tpu.vector_store %arg12[%c0_43, %c32_44], %68 {strides = array<i32>} : memref<64x72xf32, #tpu.memory_space<vmem>>, vector<64x8xf32>,
    %70 = vector.extract_strided_slice %54 {offsets = [1, 2, 0], sizes = [8, 8, 8], strides = [1, 1, 1]} : vector<10x10x8xf32> to vector<8x8x8xf32>
    %71 = vector.shape_cast %70 : vector<8x8x8xf32> to vector<64x8xf32>
    %c0_45 = arith.constant 0 : index
    %c40 = arith.constant 40 : index
    %72 = vector.load %arg12[%c0_45, %c40] : memref<64x72xf32, #tpu.memory_space<vmem>>, vector<64x8xf32>
    tpu.vector_store %arg12[%c0_45, %c40], %71 {strides = array<i32>} : memref<64x72xf32, #tpu.memory_space<vmem>>, vector<64x8xf32>,
    %73 = vector.extract_strided_slice %54 {offsets = [2, 0, 0], sizes = [8, 8, 8], strides = [1, 1, 1]} : vector<10x10x8xf32> to vector<8x8x8xf32>
    %74 = vector.shape_cast %73 : vector<8x8x8xf32> to vector<64x8xf32>
    %c0_46 = arith.constant 0 : index
    %c48 = arith.constant 48 : index
    %75 = vector.load %arg12[%c0_46, %c48] : memref<64x72xf32, #tpu.memory_space<vmem>>, vector<64x8xf32>
    tpu.vector_store %arg12[%c0_46, %c48], %74 {strides = array<i32>} : memref<64x72xf32, #tpu.memory_space<vmem>>, vector<64x8xf32>,
    %76 = vector.extract_strided_slice %54 {offsets = [2, 1, 0], sizes = [8, 8, 8], strides = [1, 1, 1]} : vector<10x10x8xf32> to vector<8x8x8xf32>
    %77 = vector.shape_cast %76 : vector<8x8x8xf32> to vector<64x8xf32>
    %c0_47 = arith.constant 0 : index
    %c56 = arith.constant 56 : index
    %78 = vector.load %arg12[%c0_47, %c56] : memref<64x72xf32, #tpu.memory_space<vmem>>, vector<64x8xf32>
    tpu.vector_store %arg12[%c0_47, %c56], %77 {strides = array<i32>} : memref<64x72xf32, #tpu.memory_space<vmem>>, vector<64x8xf32>,
    %79 = vector.extract_strided_slice %54 {offsets = [2, 2, 0], sizes = [8, 8, 8], strides = [1, 1, 1]} : vector<10x10x8xf32> to vector<8x8x8xf32>
    %80 = vector.shape_cast %79 : vector<8x8x8xf32> to vector<64x8xf32>
    %c0_48 = arith.constant 0 : index
    %c64 = arith.constant 64 : index
    %81 = vector.load %arg12[%c0_48, %c64] : memref<64x72xf32, #tpu.memory_space<vmem>>, vector<64x8xf32>
    tpu.vector_store %arg12[%c0_48, %c64], %80 {strides = array<i32>} : memref<64x72xf32, #tpu.memory_space<vmem>>, vector<64x8xf32>,
    %c0_49 = arith.constant 0 : index
    %c0_50 = arith.constant 0 : index
    %82 = vector.load %arg12[%c0_49, %c0_50] : memref<64x72xf32, #tpu.memory_space<vmem>>, vector<64x72xf32>
    %c0_51 = arith.constant 0 : index
    %c0_52 = arith.constant 0 : index
    %83 = vector.load %arg5[%c0_51, %c0_52] : memref<72x8xf32, #tpu.memory_space<vmem>>, vector<72x8xf32>
    %cst_53 = arith.constant dense<0.000000e+00> : vector<64x8xf32>
    %84 = tpu.matmul %82, %83, %cst_53 {dimension_numbers = #tpu.dot_dimension_numbers<[1], [0], [0], [1], [0, 0, 1, 1], [], []>} : vector<64x72xf32>, vector<72x8xf32>, vector<64x8xf32> -> vector<64x8xf32>
    %c0_54 = arith.constant 0 : index
    %c0_55 = arith.constant 0 : index
    %85 = vector.load %arg6[%c0_54, %c0_55] : memref<1x8xf32, #tpu.memory_space<vmem>>, vector<1x8xf32>
    %86 = vector.broadcast %85 : vector<1x8xf32> to vector<64x8xf32>
    %87 = arith.mulf %84, %86 : vector<64x8xf32>
    %c0_56 = arith.constant 0 : index
    %c0_57 = arith.constant 0 : index
    %88 = vector.load %arg7[%c0_56, %c0_57] : memref<1x8xf32, #tpu.memory_space<vmem>>, vector<1x8xf32>
    %89 = vector.broadcast %88 : vector<1x8xf32> to vector<64x8xf32>
    %90 = arith.addf %87, %89 : vector<64x8xf32>
    %cst_58 = arith.constant 0.000000e+00 : f32
    %91 = vector.broadcast %cst_58 : f32 to vector<64x8xf32>
    %92 = arith.maximumf %90, %91 : vector<64x8xf32>
    %93 = vector.shape_cast %92 : vector<64x8xf32> to vector<1x8x8x8xf32>
    %c0_59 = arith.constant 0 : index
    %c0_60 = arith.constant 0 : index
    %c0_61 = arith.constant 0 : index
    %c0_62 = arith.constant 0 : index
    %94 = vector.load %arg8[%c0_59, %c0_60, %c0_61, %c0_62] : memref<1x8x8x8xf32, #tpu.memory_space<vmem>>, vector<1x8x8x8xf32>
    tpu.vector_store %arg8[%c0_59, %c0_60, %c0_61, %c0_62], %93 {strides = array<i32>} : memref<1x8x8x8xf32, #tpu.memory_space<vmem>>, vector<1x8x8x8xf32>,
    return
  }
  func.func @transform_0(%arg0: i32) -> (i32, i32, i32, i32, i32) {
    %c0_i32 = arith.constant 0 : i32
    %c0_i32_0 = arith.constant 0 : i32
    %c0_i32_1 = arith.constant 0 : i32
    %c0_i32_2 = arith.constant 0 : i32
    %c0_i32_3 = arith.constant 0 : i32
    return %arg0, %c0_i32, %c0_i32_0, %c0_i32_1, %c0_i32_2 : i32, i32, i32, i32, i32
  }
  func.func @transform_1(%arg0: i32) -> (i32, i32) {
    %c0_i32 = arith.constant 0 : i32
    %c0_i32_0 = arith.constant 0 : i32
    %c0_i32_1 = arith.constant 0 : i32
    return %c0_i32, %c0_i32_0 : i32, i32
  }
  func.func @transform_2(%arg0: i32) -> (i32, i32) {
    %c0_i32 = arith.constant 0 : i32
    %c0_i32_0 = arith.constant 0 : i32
    %c0_i32_1 = arith.constant 0 : i32
    return %c0_i32, %c0_i32_0 : i32, i32
  }
  func.func @transform_3(%arg0: i32) -> (i32, i32) {
    %c0_i32 = arith.constant 0 : i32
    %c0_i32_0 = arith.constant 0 : i32
    %c0_i32_1 = arith.constant 0 : i32
    return %c0_i32, %c0_i32_0 : i32, i32
  }
  func.func @transform_4(%arg0: i32) -> (i32, i32) {
    %c0_i32 = arith.constant 0 : i32
    %c0_i32_0 = arith.constant 0 : i32
    %c0_i32_1 = arith.constant 0 : i32
    return %c0_i32, %c0_i32_0 : i32, i32
  }
  func.func @transform_5(%arg0: i32) -> (i32, i32) {
    %c0_i32 = arith.constant 0 : i32
    %c0_i32_0 = arith.constant 0 : i32
    %c0_i32_1 = arith.constant 0 : i32
    return %c0_i32, %c0_i32_0 : i32, i32
  }
  func.func @transform_6(%arg0: i32) -> (i32, i32) {
    %c0_i32 = arith.constant 0 : i32
    %c0_i32_0 = arith.constant 0 : i32
    %c0_i32_1 = arith.constant 0 : i32
    return %c0_i32, %c0_i32_0 : i32, i32
  }
  func.func @transform_7(%arg0: i32) -> (i32, i32, i32, i32) {
    %c0_i32 = arith.constant 0 : i32
    %c0_i32_0 = arith.constant 0 : i32
    %c0_i32_1 = arith.constant 0 : i32
    %c0_i32_2 = arith.constant 0 : i32
    return %arg0, %c0_i32, %c0_i32_0, %c0_i32_1 : i32, i32, i32, i32
  }
}

</mosaic_0001>

<llo_original>
// kernel: tpu_custom_call.1
$region0: #{tpu_custom_call.1}
  #allocation0 [shape = 'u32[]', space=smem, size = 0x4, offset = 0x4, fixed_abs, tag = 'smem constant byte address 0x4 - core index']
  #allocation1 [shape = 'u32[144,128]{1,0:T(1,128)}', space=vmem, size = 0x12000, scoped, tag = 'internal scratch']
  #allocation2 [shape = 'f32[10,10,4]{2,1,0:T(8,128)}', space=vmem, size = 0x14000, scoped, tag = 'scratch operand']
  #allocation3 [shape = 'f32[10,10,8]{2,1,0:T(8,128)}', space=vmem, size = 0x14000, scoped, tag = 'scratch operand']
  #allocation4 [shape = 'f32[64,36]{1,0:T(8,128)}', space=vmem, size = 0x8000, scoped, tag = 'scratch operand']
  #allocation5 [shape = 'f32[64,72]{1,0:T(8,128)}', space=vmem, size = 0x8000, scoped, tag = 'scratch operand']
  %s0 = inlined_call_operand.hbm [shape: f32[2,8,2,8,8], index: 0, kind: input, shape index: {}]
  %s1 = inlined_call_operand.vmem [shape: f32[36,8], index: 1, kind: input, shape index: {}]
  %s2 = inlined_call_operand.vmem [shape: f32[1,8], index: 2, kind: input, shape index: {}]
  %s3 = inlined_call_operand.vmem [shape: f32[1,8], index: 3, kind: input, shape index: {}]
  %s4 = inlined_call_operand.vmem [shape: f32[72,8], index: 4, kind: input, shape index: {}]
  %s5 = inlined_call_operand.vmem [shape: f32[1,8], index: 5, kind: input, shape index: {}]
  %s6 = inlined_call_operand.vmem [shape: f32[1,8], index: 6, kind: input, shape index: {}]
  %s7 = inlined_call_operand.hbm [shape: f32[2,8,8,8], index: 7, kind: output, shape index: {}]
  %s8 = sld [smem:[#allocation0]]
  $region69: #{tpu_custom_call.1} parent=0
    _
  %s10 = ssub.s32 1, %s8
  %s11 = scalar_select 0, %s10, %s8
  $region1: #{tpu_custom_call.1} parent=0
    #allocation6 [shape = 'u8[131072]{0}', space=vmem, size = 0x20000, scoped, tag = 'input window, operand 0']
    #allocation7 [shape = 's32[2]{0}', space=sflag, size = 0x8, scoped, tag = 'scoped memory for tpu_custom_call.1']
    #allocation8 [shape = 's32[2]{0}', space=sflag, size = 0x8, scoped, tag = 'scoped memory for tpu_custom_call.1']
    #allocation9 [shape = 'u8[65536]{0}', space=vmem, size = 0x10000, scoped, tag = 'output window, operand 0']
    %12 = vsyncpa [#allocation7], 0
    %s13 = scalar_lea.sflag [#allocation7], 1
    %14 = vsyncpa %s13, 0
    %15 = vsyncpa [#allocation8], 0
    %s16 = scalar_lea.sflag [#allocation8], 1
    %17 = vsyncpa %s16, 0
    loop: start=0, step=1, limit=4
    $region2: #{tpu_custom_call.1} parent=1 // loop_pre_header
      _
    $region3: #{tpu_custom_call.1} parent=1 // loop_header
      %s19 = sphi 0, %s23
      %p20 = scmp.ge.s32.totalorder %s19, 4
      %s29 = sphi 0, %s31
      %s32 = sphi 0, %s29
      %s33 = sphi 0, %s32
      %s49 = sphi 0, %s33
      %s53 = sphi 0, %s53
      %s55 = sphi 0, %s53
      %s56 = sphi 0, %s55
      %s70 = sphi 0, %s56
      %s74 = sphi 0, %s74
      %s76 = sphi 0, %s74
      %s77 = sphi 0, %s76
      %s91 = sphi 0, %s77
      %s95 = sphi 0, %s95
      %s97 = sphi 0, %s95
      %s98 = sphi 0, %s97
      %s112 = sphi 0, %s98
      %s116 = sphi 0, %s116
      %s118 = sphi 0, %s116
      %s119 = sphi 0, %s118
      %s133 = sphi 0, %s119
      %s137 = sphi 0, %s137
      %s139 = sphi 0, %s137
      %s140 = sphi 0, %s139
      %s154 = sphi 0, %s140
      %s158 = sphi 0, %s158
      %s160 = sphi 0, %s158
      %s161 = sphi 0, %s160
      %s175 = sphi 0, %s161
      %s181 = sphi 0, %s183
      %s184 = sphi 0, %s181
      %s185 = sphi 0, %s184
      %s201 = sphi 0, %s185
    $region4: #{tpu_custom_call.1} parent=1 // loop_header_branch
      %22 = sbr.rel (%p20) target = $region8
    $region5: #{tpu_custom_call.1} parent=1 // loop_body
      %s24 = ssub.s32 %s19, 1
      %s25 = ssub.s32 %s19, 2
      %s26 = sadd.s32 %s19, 1
      %s27 = ssub.s32 %s19, %s26
      %p28 = scmp.eq.s32.totalorder %s27, 0
      %s30 = sadd.s32 %s29, 1
      %s31 = scalar_select %p28, %s29, %s30
      %p34 = pneg %p28
      %p35 = scmp.eq.s32.totalorder %s19, 1
      %p36 = por %p34, %p35
      %p37 = scmp.ne.s32.totalorder %s29, %s32
      %p38 = scmp.eq.s32.totalorder %s19, 0
      %p39 = por %p37, %p38
      %p40 = scmp.ne.s32.totalorder %s29, %s32
      %p41 = scmp.eq.s32.totalorder %s24, 1
      %p42 = por %p40, %p41
      %p43 = scmp.ne.s32.totalorder %s32, %s33
      %p44 = scmp.eq.s32.totalorder %s24, 0
      %p45 = por %p43, %p44
      %p46 = scmp.ne.s32.totalorder %s32, %s33
      %p47 = scmp.eq.s32.totalorder %s25, 1
      %p48 = por %p46, %p47
      %p50 = scmp.ne.s32.totalorder %s33, %s49
      %p51 = scmp.eq.s32.totalorder %s25, 0
      %p52 = por %p50, %p51
      %s54 = sadd.s32 %s53, 1
      %p57 = scmp.eq.s32.totalorder %s19, 1
      %p58 = scmp.ne.s32.totalorder %s53, %s55
      %p59 = scmp.eq.s32.totalorder %s19, 0
      %p60 = por %p58, %p59
      %p61 = scmp.ne.s32.totalorder %s53, %s55
      %p62 = scmp.eq.s32.totalorder %s24, 1
      %p63 = por %p61, %p62
      %p64 = scmp.ne.s32.totalorder %s55, %s56
      %p65 = scmp.eq.s32.totalorder %s24, 0
      %p66 = por %p64, %p65
      %p67 = scmp.ne.s32.totalorder %s55, %s56
      %p68 = scmp.eq.s32.totalorder %s25, 1
      %p69 = por %p67, %p68
      %p71 = scmp.ne.s32.totalorder %s56, %s70
      %p72 = scmp.eq.s32.totalorder %s25, 0
      %p73 = por %p71, %p72
      %s75 = sadd.s32 %s74, 1
      %p78 = scmp.eq.s32.totalorder %s19, 1
      %p79 = scmp.ne.s32.totalorder %s74, %s76
      %p80 = scmp.eq.s32.totalorder %s19, 0
      %p81 = por %p79, %p80
      %p82 = scmp.ne.s32.totalorder %s74, %s76
      %p83 = scmp.eq.s32.totalorder %s24, 1
      %p84 = por %p82, %p83
      %p85 = scmp.ne.s32.totalorder %s76, %s77
      %p86 = scmp.eq.s32.totalorder %s24, 0
      %p87 = por %p85, %p86
      %p88 = scmp.ne.s32.totalorder %s76, %s77
      %p89 = scmp.eq.s32.totalorder %s25, 1
      %p90 = por %p88, %p89
      %p92 = scmp.ne.s32.totalorder %s77, %s91
      %p93 = scmp.eq.s32.totalorder %s25, 0
      %p94 = por %p92, %p93
      %s96 = sadd.s32 %s95, 1
      %p99 = scmp.eq.s32.totalorder %s19, 1
      %p100 = scmp.ne.s32.totalorder %s95, %s97
      %p101 = scmp.eq.s32.totalorder %s19, 0
      %p102 = por %p100, %p101
      %p103 = scmp.ne.s32.totalorder %s95, %s97
      %p104 = scmp.eq.s32.totalorder %s24, 1
      %p105 = por %p103, %p104
      %p106 = scmp.ne.s32.totalorder %s97, %s98
      %p107 = scmp.eq.s32.totalorder %s24, 0
      %p108 = por %p106, %p107
      %p109 = scmp.ne.s32.totalorder %s97, %s98
      %p110 = scmp.eq.s32.totalorder %s25, 1
      %p111 = por %p109, %p110
      %p113 = scmp.ne.s32.totalorder %s98, %s112
      %p114 = scmp.eq.s32.totalorder %s25, 0
      %p115 = por %p113, %p114
      %s117 = sadd.s32 %s116, 1
      %p120 = scmp.eq.s32.totalorder %s19, 1
      %p121 = scmp.ne.s32.totalorder %s116, %s118
      %p122 = scmp.eq.s32.totalorder %s19, 0
      %p123 = por %p121, %p122
      %p124 = scmp.ne.s32.totalorder %s116, %s118
      %p125 = scmp.eq.s32.totalorder %s24, 1
      %p126 = por %p124, %p125
      %p127 = scmp.ne.s32.totalorder %s118, %s119
      %p128 = scmp.eq.s32.totalorder %s24, 0
      %p129 = por %p127, %p128
      %p130 = scmp.ne.s32.totalorder %s118, %s119
      %p131 = scmp.eq.s32.totalorder %s25, 1
      %p132 = por %p130, %p131
      %p134 = scmp.ne.s32.totalorder %s119, %s133
      %p135 = scmp.eq.s32.totalorder %s25, 0
      %p136 = por %p134, %p135
      %s138 = sadd.s32 %s137, 1
      %p141 = scmp.eq.s32.totalorder %s19, 1
      %p142 = scmp.ne.s32.totalorder %s137, %s139
      %p143 = scmp.eq.s32.totalorder %s19, 0
      %p144 = por %p142, %p143
      %p145 = scmp.ne.s32.totalorder %s137, %s139
      %p146 = scmp.eq.s32.totalorder %s24, 1
      %p147 = por %p145, %p146
      %p148 = scmp.ne.s32.totalorder %s139, %s140
      %p149 = scmp.eq.s32.totalorder %s24, 0
      %p150 = por %p148, %p149
      %p151 = scmp.ne.s32.totalorder %s139, %s140
      %p152 = scmp.eq.s32.totalorder %s25, 1
      %p153 = por %p151, %p152
      %p155 = scmp.ne.s32.totalorder %s140, %s154
      %p156 = scmp.eq.s32.totalorder %s25, 0
      %p157 = por %p155, %p156
      %s159 = sadd.s32 %s158, 1
      %p162 = scmp.eq.s32.totalorder %s19, 1
      %p163 = scmp.ne.s32.totalorder %s158, %s160
      %p164 = scmp.eq.s32.totalorder %s19, 0
      %p165 = por %p163, %p164
      %p166 = scmp.ne.s32.totalorder %s158, %s160
      %p167 = scmp.eq.s32.totalorder %s24, 1
      %p168 = por %p166, %p167
      %p169 = scmp.ne.s32.totalorder %s160, %s161
      %p170 = scmp.eq.s32.totalorder %s24, 0
      %p171 = por %p169, %p170
      %p172 = scmp.ne.s32.totalorder %s160, %s161
      %p173 = scmp.eq.s32.totalorder %s25, 1
      %p174 = por %p172, %p173
      %p176 = scmp.ne.s32.totalorder %s161, %s175
      %p177 = scmp.eq.s32.totalorder %s25, 0
      %p178 = por %p176, %p177
      %s179 = ssub.s32 %s19, %s26
      %p180 = scmp.eq.s32.totalorder %s179, 0
      %s182 = sadd.s32 %s181, 1
      %s183 = scalar_select %p180, %s181, %s182
      %p186 = pneg %p180
      %p187 = scmp.eq.s32.totalorder %s19, 1
      %p188 = por %p186, %p187
      %p189 = scmp.ne.s32.totalorder %s181, %s184
      %p190 = scmp.eq.s32.totalorder %s19, 0
      %p191 = por %p189, %p190
      %p192 = scmp.ne.s32.totalorder %s181, %s184
      %p193 = scmp.eq.s32.totalorder %s24, 1
      %p194 = por %p192, %p193
      %p195 = scmp.ne.s32.totalorder %s184, %s185
      %p196 = scmp.eq.s32.totalorder %s24, 0
      %p197 = por %p195, %p196
      %p198 = scmp.ne.s32.totalorder %s184, %s185
      %p199 = scmp.eq.s32.totalorder %s25, 1
      %p200 = por %p198, %p199
      %p202 = scmp.ne.s32.totalorder %s185, %s201
      %p203 = scmp.eq.s32.totalorder %s25, 0
      %p204 = por %p202, %p203
      %p205 = scmp.le.s32.totalorder 1, %s19
      %p206 = scmp.lt.s32.totalorder %s19, 3
      %p207 = pnand %p205, %p206
      %p208 = pneg %p207
      // Predicated region
      $region9: #{tpu_custom_call.1} parent=5 // pred_check
        _
      $region10: #{tpu_custom_call.1} parent=5 // pred_check_branch
        %210 = sbr.rel (%p207) target = $region12
      $region11: #{tpu_custom_call.1} parent=5 // pred_region
        %s211 = ssub.s32 %s19, 1
        // Predicated region
        $region13: #{tpu_custom_call.1} parent=11 // pred_check
          %p212 = pneg %p66
        $region14: #{tpu_custom_call.1} parent=11 // pred_check_branch
          %214 = sbr.rel (%p212) target = $region16
        $region15: #{tpu_custom_call.1} parent=11 // pred_region
          _
        $region16: #{tpu_custom_call.1} parent=11 // pred_fallthru
          _
        // Predicated region
        $region17: #{tpu_custom_call.1} parent=11 // pred_check
          %p215 = pneg %p87
        $region18: #{tpu_custom_call.1} parent=11 // pred_check_branch
          %217 = sbr.rel (%p215) target = $region20
        $region19: #{tpu_custom_call.1} parent=11 // pred_region
          _
        $region20: #{tpu_custom_call.1} parent=11 // pred_fallthru
          _
        // Predicated region
        $region21: #{tpu_custom_call.1} parent=11 // pred_check
          %p218 = pneg %p108
        $region22: #{tpu_custom_call.1} parent=11 // pred_check_branch
          %220 = sbr.rel (%p218) target = $region24
        $region23: #{tpu_custom_call.1} parent=11 // pred_region
          _
        $region24: #{tpu_custom_call.1} parent=11 // pred_fallthru
          _
        // Predicated region
        $region25: #{tpu_custom_call.1} parent=11 // pred_check
          %p221 = pneg %p129
        $region26: #{tpu_custom_call.1} parent=11 // pred_check_branch
          %223 = sbr.rel (%p221) target = $region28
        $region27: #{tpu_custom_call.1} parent=11 // pred_region
          _
        $region28: #{tpu_custom_call.1} parent=11 // pred_fallthru
          _
        // Predicated region
        $region29: #{tpu_custom_call.1} parent=11 // pred_check
          %p224 = pneg %p150
        $region30: #{tpu_custom_call.1} parent=11 // pred_check_branch
          %226 = sbr.rel (%p224) target = $region32
        $region31: #{tpu_custom_call.1} parent=11 // pred_region
          _
        $region32: #{tpu_custom_call.1} parent=11 // pred_fallthru
          _
        // Predicated region
        $region33: #{tpu_custom_call.1} parent=11 // pred_check
          %p227 = pneg %p171
        $region34: #{tpu_custom_call.1} parent=11 // pred_check_branch
          %229 = sbr.rel (%p227) target = $region36
        $region35: #{tpu_custom_call.1} parent=11 // pred_region
          _
        $region36: #{tpu_custom_call.1} parent=11 // pred_fallthru
          _
      $region12: #{tpu_custom_call.1} parent=5 // pred_fallthru
        _
      %p230 = scmp.lt.s32.totalorder %s19, 2
      // Predicated region
      $region37: #{tpu_custom_call.1} parent=5 // pred_check
        %p231 = pneg %p230
      $region38: #{tpu_custom_call.1} parent=5 // pred_check_branch
        %233 = sbr.rel (%p231) target = $region40
      $region39: #{tpu_custom_call.1} parent=5 // pred_region
        // Predicated region
        $region41: #{tpu_custom_call.1} parent=39 // pred_check
          %p234 = pneg %p39
        $region42: #{tpu_custom_call.1} parent=39 // pred_check_branch
          %236 = sbr.rel (%p234) target = $region44
        $region43: #{tpu_custom_call.1} parent=39 // pred_region
          %s237 = sand.u32 %s29, 1
          %s238 = scalar_lea.sflag [#allocation7], %s237
          %s239 = sand.u32 %s29, 1
          %s240 = smul.addr %s239, 128
          %s241 = scalar_lea.vmem [#allocation6], %s240
          %s243 = ssub.s32 2048, 2048
          %244 = vsyncadd %s238, %s243
          %s245 = smul.addr %s19, 16
          %s246 = smul.addr %s245, 128
          %s247 = scalar_lea.hbm %s0, %s246
          %s248 = sshll.u32 %s241, 4
          %s249 = int_to_ptr.vmem [resolvable:$true] %s248
          %254 = dma.hbm_to_vmem [thread:$0]  %s247, 2048, %s249, %s238, 128, 128, 8
        $region44: #{tpu_custom_call.1} parent=39 // pred_fallthru
          _
      $region40: #{tpu_custom_call.1} parent=5 // pred_fallthru
        _
      %p255 = scmp.le.s32.totalorder 1, %s19
      %p256 = scmp.lt.s32.totalorder %s19, 3
      %p257 = pnand %p255, %p256
      %p258 = pneg %p257
      // Predicated region
      $region45: #{tpu_custom_call.1} parent=5 // pred_check
        _
      $region46: #{tpu_custom_call.1} parent=5 // pred_check_branch
        %260 = sbr.rel (%p257) target = $region48
      $region47: #{tpu_custom_call.1} parent=5 // pred_region
        %s261 = ssub.s32 %s19, 1
        %s262 = sand.u32 %s32, 1
        %s263 = scalar_lea.sflag [#allocation7], %s262
        %s264 = sand.u32 %s32, 1
        %s265 = smul.addr %s264, 128
        %s266 = scalar_lea.vmem [#allocation6], %s265
        // Predicated region
        $region49: #{tpu_custom_call.1} parent=47 // pred_check
          %p267 = pneg %p45
        $region50: #{tpu_custom_call.1} parent=47 // pred_check_branch
          %269 = sbr.rel (%p267) target = $region52
        $region51: #{tpu_custom_call.1} parent=47 // pred_region
          %270 = dma.done %s263, 2048
        $region52: #{tpu_custom_call.1} parent=47 // pred_fallthru
          _
        %s271 = sand.u32 %s32, 1
        %s272 = scalar_lea.sflag [#allocation7], %s271
        %s273 = sand.u32 %s32, 1
        %s274 = smul.addr %s273, 128
        %s275 = scalar_lea.vmem [#allocation6], %s274
        %p276 = pneg %p45
        %p277 = pneg %p42
        %p278 = pneg %p66
        %p279 = pneg %p63
        %p280 = pneg %p87
        %p281 = pneg %p84
        %p282 = pneg %p108
        %p283 = pneg %p105
        %p284 = pneg %p129
        %p285 = pneg %p126
        %p286 = pneg %p150
        %p287 = pneg %p147
        %p288 = pneg %p171
        %p289 = pneg %p168
        %p290 = pneg %p197
        %p291 = pneg %p194
        %s292 = sand.u32 %s184, 1
        %s293 = scalar_lea.sflag [#allocation8], %s292
        %s294 = sand.u32 %s184, 1
        %s295 = smul.addr %s294, 64
        %s296 = scalar_lea.vmem [#allocation9], %s295
        %p297 = scmp.eq.s32.totalorder %s24, 0
        // Predicated region
        $region53: #{tpu_custom_call.1} parent=47 // pred_check
          %p298 = pneg %p297
        $region54: #{tpu_custom_call.1} parent=47 // pred_check_branch
          %300 = sbr.rel (%p298) target = $region56
        $region55: #{tpu_custom_call.1} parent=47 // pred_region
          %vm301 = vcmask 31744
          %302 = vst.msk [vmem:[#allocation2] sm:$0xff] %vm301, 0.0
          %vm303 = vcmask 25600
          %304 = vst.msk [vmem:[#allocation2 + $0x8] sm:$0x3] %vm303, 0.0
          %305 = vst.msk [vmem:[#allocation2 + $0x10] sm:$0xff] %vm301, 0.0
          %306 = vst.msk [vmem:[#allocation2 + $0x18] sm:$0x3] %vm303, 0.0
          %307 = vst.msk [vmem:[#allocation2 + $0x20] sm:$0xff] %vm301, 0.0
          %308 = vst.msk [vmem:[#allocation2 + $0x28] sm:$0x3] %vm303, 0.0
          %309 = vst.msk [vmem:[#allocation2 + $0x30] sm:$0xff] %vm301, 0.0
          %310 = vst.msk [vmem:[#allocation2 + $0x38] sm:$0x3] %vm303, 0.0
          %311 = vst.msk [vmem:[#allocation2 + $0x40] sm:$0xff] %vm301, 0.0
          %312 = vst.msk [vmem:[#allocation2 + $0x48] sm:$0x3] %vm303, 0.0
          %313 = vst.msk [vmem:[#allocation2 + $0x50] sm:$0xff] %vm301, 0.0
          %314 = vst.msk [vmem:[#allocation2 + $0x58] sm:$0x3] %vm303, 0.0
          %315 = vst.msk [vmem:[#allocation2 + $0x60] sm:$0xff] %vm301, 0.0
          %316 = vst.msk [vmem:[#allocation2 + $0x68] sm:$0x3] %vm303, 0.0
          %317 = vst.msk [vmem:[#allocation2 + $0x70] sm:$0xff] %vm301, 0.0
          %318 = vst.msk [vmem:[#allocation2 + $0x78] sm:$0x3] %vm303, 0.0
          %319 = vst.msk [vmem:[#allocation2 + $0x80] sm:$0xff] %vm301, 0.0
          %320 = vst.msk [vmem:[#allocation2 + $0x88] sm:$0x3] %vm303, 0.0
          %321 = vst.msk [vmem:[#allocation2 + $0x90] sm:$0xff] %vm301, 0.0
          %322 = vst.msk [vmem:[#allocation2 + $0x98] sm:$0x3] %vm303, 0.0
          %vm323 = vcmask 64512
          %324 = vst.msk [vmem:[#allocation3] sm:$0xff] %vm323, 0.0
          %vm325 = vcmask 58368
          %326 = vst.msk [vmem:[#allocation3 + $0x8] sm:$0x3] %vm325, 0.0
          %327 = vst.msk [vmem:[#allocation3 + $0x10] sm:$0xff] %vm323, 0.0
          %328 = vst.msk [vmem:[#allocation3 + $0x18] sm:$0x3] %vm325, 0.0
          %329 = vst.msk [vmem:[#allocation3 + $0x20] sm:$0xff] %vm323, 0.0
          %330 = vst.msk [vmem:[#allocation3 + $0x28] sm:$0x3] %vm325, 0.0
          %331 = vst.msk [vmem:[#allocation3 + $0x30] sm:$0xff] %vm323, 0.0
          %332 = vst.msk [vmem:[#allocation3 + $0x38] sm:$0x3] %vm325, 0.0
          %333 = vst.msk [vmem:[#allocation3 + $0x40] sm:$0xff] %vm323, 0.0
          %334 = vst.msk [vmem:[#allocation3 + $0x48] sm:$0x3] %vm325, 0.0
          %335 = vst.msk [vmem:[#allocation3 + $0x50] sm:$0xff] %vm323, 0.0
          %336 = vst.msk [vmem:[#allocation3 + $0x58] sm:$0x3] %vm325, 0.0
          %337 = vst.msk [vmem:[#allocation3 + $0x60] sm:$0xff] %vm323, 0.0
          %338 = vst.msk [vmem:[#allocation3 + $0x68] sm:$0x3] %vm325, 0.0
          %339 = vst.msk [vmem:[#allocation3 + $0x70] sm:$0xff] %vm323, 0.0
          %340 = vst.msk [vmem:[#allocation3 + $0x78] sm:$0x3] %vm325, 0.0
          %341 = vst.msk [vmem:[#allocation3 + $0x80] sm:$0xff] %vm323, 0.0
          %342 = vst.msk [vmem:[#allocation3 + $0x88] sm:$0x3] %vm325, 0.0
          %343 = vst.msk [vmem:[#allocation3 + $0x90] sm:$0xff] %vm323, 0.0
          %344 = vst.msk [vmem:[#allocation3 + $0x98] sm:$0x3] %vm325, 0.0
        $region56: #{tpu_custom_call.1} parent=47 // pred_fallthru
          _
        %v345 = vld [vmem:[%s266] sm:$0xff]
        %v346 = vld [vmem:[%s266 + $0x8] sm:$0xff]
        %v347 = vld [vmem:[%s266 + $0x10] sm:$0xff]
        %v348 = vld [vmem:[%s266 + $0x18] sm:$0xff]
        %v349 = vld [vmem:[%s266 + $0x20] sm:$0xff]
        %v350 = vld [vmem:[%s266 + $0x28] sm:$0xff]
        %v351 = vld [vmem:[%s266 + $0x30] sm:$0xff]
        %v352 = vld [vmem:[%s266 + $0x38] sm:$0xff]
        %v353 = vld [vmem:[%s266 + $0x40] sm:$0xff]
        %v354 = vld [vmem:[%s266 + $0x48] sm:$0xff]
        %v355 = vld [vmem:[%s266 + $0x50] sm:$0xff]
        %v356 = vld [vmem:[%s266 + $0x58] sm:$0xff]
        %v357 = vld [vmem:[%s266 + $0x60] sm:$0xff]
        %v358 = vld [vmem:[%s266 + $0x68] sm:$0xff]
        %v359 = vld [vmem:[%s266 + $0x70] sm:$0xff]
        %v360 = vld [vmem:[%s266 + $0x78] sm:$0xff]
        %v361 = vmax.f32 %v345, %v346
        %v362 = vmax.f32 %v347, %v348
        %v363 = vmax.f32 %v349, %v350
        %v364 = vmax.f32 %v351, %v352
        %v365 = vmax.f32 %v353, %v354
        %v366 = vmax.f32 %v355, %v356
        %v367 = vmax.f32 %v357, %v358
        %v368 = vmax.f32 %v359, %v360
        %377 = vrot.lane.b32.xlu0 %v361, 124
        %v378 = vpop.permute.xlu0 %377
        %379 = vrot.lane.b32.xlu0 %v362, 124
        %v380 = vpop.permute.xlu0 %379
        %381 = vrot.lane.b32.xlu0 %v363, 124
        %v382 = vpop.permute.xlu0 %381
        %383 = vrot.lane.b32.xlu0 %v364, 124
        %v384 = vpop.permute.xlu0 %383
        %385 = vrot.lane.b32.xlu0 %v365, 124
        %v386 = vpop.permute.xlu0 %385
        %387 = vrot.lane.b32.xlu0 %v366, 124
        %v388 = vpop.permute.xlu0 %387
        %389 = vrot.lane.b32.xlu0 %v367, 124
        %v390 = vpop.permute.xlu0 %389
        %391 = vrot.lane.b32.xlu0 %v368, 124
        %v392 = vpop.permute.xlu0 %391
        %v401 = vmax.f32 %v361, %v378
        %v402 = vmax.f32 %v362, %v380
        %v403 = vmax.f32 %v363, %v382
        %v404 = vmax.f32 %v364, %v384
        %v405 = vmax.f32 %v365, %v386
        %v406 = vmax.f32 %v366, %v388
        %v407 = vmax.f32 %v367, %v390
        %v408 = vmax.f32 %v368, %v392
        %s409 = scalar_lea.vmem [#allocation2], 16
        %vm410 = vcmask 31744
        %411 = vst.msk [vmem:[%s409 + $0x1] sm:$0xff] %vm410, %v401
        %412 = vst.msk [vmem:[%s409 + $0x11] sm:$0xff] %vm410, %v402
        %413 = vst.msk [vmem:[%s409 + $0x21] sm:$0xff] %vm410, %v403
        %414 = vst.msk [vmem:[%s409 + $0x31] sm:$0xff] %vm410, %v404
        %415 = vst.msk [vmem:[%s409 + $0x41] sm:$0xff] %vm410, %v405
        %416 = vst.msk [vmem:[%s409 + $0x51] sm:$0xff] %vm410, %v406
        %417 = vst.msk [vmem:[%s409 + $0x61] sm:$0xff] %vm410, %v407
        %418 = vst.msk [vmem:[%s409 + $0x71] sm:$0xff] %vm410, %v408
        %v419 = vld [vmem:[#allocation2] sm:$0xff]
        %v420 = vld [vmem:[#allocation2 + $0x8] sm:$0x3]
        %v421 = vld [vmem:[#allocation2 + $0x10] sm:$0xff]
        %v422 = vld [vmem:[#allocation2 + $0x18] sm:$0x3]
        %v423 = vld [vmem:[#allocation2 + $0x20] sm:$0xff]
        %v424 = vld [vmem:[#allocation2 + $0x28] sm:$0x3]
        %v425 = vld [vmem:[#allocation2 + $0x30] sm:$0xff]
        %v426 = vld [vmem:[#allocation2 + $0x38] sm:$0x3]
        %v427 = vld [vmem:[#allocation2 + $0x40] sm:$0xff]
        %v428 = vld [vmem:[#allocation2 + $0x48] sm:$0x3]
        %v429 = vld [vmem:[#allocation2 + $0x50] sm:$0xff]
        %v430 = vld [vmem:[#allocation2 + $0x58] sm:$0x3]
        %v431 = vld [vmem:[#allocation2 + $0x60] sm:$0xff]
        %v432 = vld [vmem:[#allocation2 + $0x68] sm:$0x3]
        %v433 = vld [vmem:[#allocation2 + $0x70] sm:$0xff]
        %v434 = vld [vmem:[#allocation2 + $0x78] sm:$0x3]
        %v435 = vld [vmem:[#allocation2 + $0x80] sm:$0xff]
        %v436 = vld [vmem:[#allocation2 + $0x88] sm:$0x3]
        %v437 = vld [vmem:[#allocation2 + $0x90] sm:$0xff]
        %v438 = vld [vmem:[#allocation2 + $0x98] sm:$0x3]
        %439 = vst.msk [vmem:[#allocation4] sm:$0xff] %vm410, %v419
        %440 = vst.msk [vmem:[#allocation4 + $0x8] sm:$0xff] %vm410, %v421
        %441 = vst.msk [vmem:[#allocation4 + $0x10] sm:$0xff] %vm410, %v423
        %442 = vst.msk [vmem:[#allocation4 + $0x18] sm:$0xff] %vm410, %v425
        %443 = vst.msk [vmem:[#allocation4 + $0x20] sm:$0xff] %vm410, %v427
        %444 = vst.msk [vmem:[#allocation4 + $0x28] sm:$0xff] %vm410, %v429
        %445 = vst.msk [vmem:[#allocation4 + $0x30] sm:$0xff] %vm410, %v431
        %446 = vst.msk [vmem:[#allocation4 + $0x38] sm:$0xff] %vm410, %v433
        %vm463 = vcmask 1046528
        %v464 = vrot.slane %v419, 1
        %v465 = vrot.slane %v420, 1
        %v466 = vsel %vm463, %v464, %v465
        %v467 = vrot.slane %v421, 1
        %v468 = vrot.slane %v422, 1
        %v469 = vsel %vm463, %v467, %v468
        %v470 = vrot.slane %v423, 1
        %v471 = vrot.slane %v424, 1
        %v472 = vsel %vm463, %v470, %v471
        %v473 = vrot.slane %v425, 1
        %v474 = vrot.slane %v426, 1
        %v475 = vsel %vm463, %v473, %v474
        %v476 = vrot.slane %v427, 1
        %v477 = vrot.slane %v428, 1
        %v478 = vsel %vm463, %v476, %v477
        %v479 = vrot.slane %v429, 1
        %v480 = vrot.slane %v430, 1
        %v481 = vsel %vm463, %v479, %v480
        %v482 = vrot.slane %v431, 1
        %v483 = vrot.slane %v432, 1
        %v484 = vsel %vm463, %v482, %v483
        %v485 = vrot.slane %v433, 1
        %v486 = vrot.slane %v434, 1
        %v487 = vsel %vm463, %v485, %v486
        %488 = vrot.lane.b32.xlu0 %v466, 4
        %v489 = vpop.permute.xlu0 %488
        %490 = vrot.lane.b32.xlu0 %v469, 4
        %v491 = vpop.permute.xlu0 %490
        %492 = vrot.lane.b32.xlu0 %v472, 4
        %v493 = vpop.permute.xlu0 %492
        %494 = vrot.lane.b32.xlu0 %v475, 4
        %v495 = vpop.permute.xlu0 %494
        %496 = vrot.lane.b32.xlu0 %v478, 4
        %v497 = vpop.permute.xlu0 %496
        %498 = vrot.lane.b32.xlu0 %v481, 4
        %v499 = vpop.permute.xlu0 %498
        %500 = vrot.lane.b32.xlu0 %v484, 4
        %v501 = vpop.permute.xlu0 %500
        %502 = vrot.lane.b32.xlu0 %v487, 4
        %v503 = vpop.permute.xlu0 %502
        %vm512 = vcmask 64544
        %513 = vst.msk [vmem:[#allocation4] sm:$0xff] %vm512, %v489
        %514 = vst.msk [vmem:[#allocation4 + $0x8] sm:$0xff] %vm512, %v491
        %515 = vst.msk [vmem:[#allocation4 + $0x10] sm:$0xff] %vm512, %v493
        %516 = vst.msk [vmem:[#allocation4 + $0x18] sm:$0xff] %vm512, %v495
        %517 = vst.msk [vmem:[#allocation4 + $0x20] sm:$0xff] %vm512, %v497
        %518 = vst.msk [vmem:[#allocation4 + $0x28] sm:$0xff] %vm512, %v499
        %519 = vst.msk [vmem:[#allocation4 + $0x30] sm:$0xff] %vm512, %v501
        %520 = vst.msk [vmem:[#allocation4 + $0x38] sm:$0xff] %vm512, %v503
        %vm521 = vcmask 1045504
        %v522 = vrot.slane %v419, 2
        %v523 = vrot.slane %v420, 2
        %v524 = vsel %vm521, %v522, %v523
        %v525 = vrot.slane %v421, 2
        %v526 = vrot.slane %v422, 2
        %v527 = vsel %vm521, %v525, %v526
        %v528 = vrot.slane %v423, 2
        %v529 = vrot.slane %v424, 2
        %v530 = vsel %vm521, %v528, %v529
        %v531 = vrot.slane %v425, 2
        %v532 = vrot.slane %v426, 2
        %v533 = vsel %vm521, %v531, %v532
        %v534 = vrot.slane %v427, 2
        %v535 = vrot.slane %v428, 2
        %v536 = vsel %vm521, %v534, %v535
        %v537 = vrot.slane %v429, 2
        %v538 = vrot.slane %v430, 2
        %v539 = vsel %vm521, %v537, %v538
        %v540 = vrot.slane %v431, 2
        %v541 = vrot.slane %v432, 2
        %v542 = vsel %vm521, %v540, %v541
        %v543 = vrot.slane %v433, 2
        %v544 = vrot.slane %v434, 2
        %v545 = vsel %vm521, %v543, %v544
        %546 = vrot.lane.b32.xlu0 %v524, 8
        %v547 = vpop.permute.xlu0 %546
        %548 = vrot.lane.b32.xlu0 %v527, 8
        %v549 = vpop.permute.xlu0 %548
        %550 = vrot.lane.b32.xlu0 %v530, 8
        %v551 = vpop.permute.xlu0 %550
        %552 = vrot.lane.b32.xlu0 %v533, 8
        %v553 = vpop.permute.xlu0 %552
        %554 = vrot.lane.b32.xlu0 %v536, 8
        %v555 = vpop.permute.xlu0 %554
        %556 = vrot.lane.b32.xlu0 %v539, 8
        %v557 = vpop.permute.xlu0 %556
        %558 = vrot.lane.b32.xlu0 %v542, 8
        %v559 = vpop.permute.xlu0 %558
        %560 = vrot.lane.b32.xlu0 %v545, 8
        %v561 = vpop.permute.xlu0 %560
        %vm570 = vcmask 97344
        %571 = vst.msk [vmem:[#allocation4] sm:$0xff] %vm570, %v547
        %572 = vst.msk [vmem:[#allocation4 + $0x8] sm:$0xff] %vm570, %v549
        %573 = vst.msk [vmem:[#allocation4 + $0x10] sm:$0xff] %vm570, %v551
        %574 = vst.msk [vmem:[#allocation4 + $0x18] sm:$0xff] %vm570, %v553
        %575 = vst.msk [vmem:[#allocation4 + $0x20] sm:$0xff] %vm570, %v555
        %576 = vst.msk [vmem:[#allocation4 + $0x28] sm:$0xff] %vm570, %v557
        %577 = vst.msk [vmem:[#allocation4 + $0x30] sm:$0xff] %vm570, %v559
        %578 = vst.msk [vmem:[#allocation4 + $0x38] sm:$0xff] %vm570, %v561
        %580 = vrot.lane.b32.xlu0 %v421, 12
        %v581 = vpop.permute.xlu0 %580
        %582 = vrot.lane.b32.xlu0 %v423, 12
        %v583 = vpop.permute.xlu0 %582
        %584 = vrot.lane.b32.xlu0 %v425, 12
        %v585 = vpop.permute.xlu0 %584
        %586 = vrot.lane.b32.xlu0 %v427, 12
        %v587 = vpop.permute.xlu0 %586
        %588 = vrot.lane.b32.xlu0 %v429, 12
        %v589 = vpop.permute.xlu0 %588
        %590 = vrot.lane.b32.xlu0 %v431, 12
        %v591 = vpop.permute.xlu0 %590
        %592 = vrot.lane.b32.xlu0 %v433, 12
        %v593 = vpop.permute.xlu0 %592
        %594 = vrot.lane.b32.xlu0 %v435, 12
        %v595 = vpop.permute.xlu0 %594
        %vm604 = vcmask 130144
        %605 = vst.msk [vmem:[#allocation4] sm:$0xff] %vm604, %v581
        %606 = vst.msk [vmem:[#allocation4 + $0x8] sm:$0xff] %vm604, %v583
        %607 = vst.msk [vmem:[#allocation4 + $0x10] sm:$0xff] %vm604, %v585
        %608 = vst.msk [vmem:[#allocation4 + $0x18] sm:$0xff] %vm604, %v587
        %609 = vst.msk [vmem:[#allocation4 + $0x20] sm:$0xff] %vm604, %v589
        %610 = vst.msk [vmem:[#allocation4 + $0x28] sm:$0xff] %vm604, %v591
        %611 = vst.msk [vmem:[#allocation4 + $0x30] sm:$0xff] %vm604, %v593
        %612 = vst.msk [vmem:[#allocation4 + $0x38] sm:$0xff] %vm604, %v595
        %v614 = vrot.slane %v435, 1
        %v615 = vrot.slane %v436, 1
        %v616 = vsel %vm463, %v614, %v615
        %617 = vrot.lane.b32.xlu0 %v469, 16
        %v618 = vpop.permute.xlu0 %617
        %619 = vrot.lane.b32.xlu0 %v472, 16
        %v620 = vpop.permute.xlu0 %619
        %621 = vrot.lane.b32.xlu0 %v475, 16
        %v622 = vpop.permute.xlu0 %621
        %623 = vrot.lane.b32.xlu0 %v478, 16
        %v624 = vpop.permute.xlu0 %623
        %625 = vrot.lane.b32.xlu0 %v481, 16
        %v626 = vpop.permute.xlu0 %625
        %627 = vrot.lane.b32.xlu0 %v484, 16
        %v628 = vpop.permute.xlu0 %627
        %629 = vrot.lane.b32.xlu0 %v487, 16
        %v630 = vpop.permute.xlu0 %629
        %631 = vrot.lane.b32.xlu0 %v616, 16
        %v632 = vpop.permute.xlu0 %631
        %vm641 = vcmask 162944
        %642 = vst.msk [vmem:[#allocation4] sm:$0xff] %vm641, %v618
        %643 = vst.msk [vmem:[#allocation4 + $0x8] sm:$0xff] %vm641, %v620
        %644 = vst.msk [vmem:[#allocation4 + $0x10] sm:$0xff] %vm641, %v622
        %645 = vst.msk [vmem:[#allocation4 + $0x18] sm:$0xff] %vm641, %v624
        %646 = vst.msk [vmem:[#allocation4 + $0x20] sm:$0xff] %vm641, %v626
        %647 = vst.msk [vmem:[#allocation4 + $0x28] sm:$0xff] %vm641, %v628
        %648 = vst.msk [vmem:[#allocation4 + $0x30] sm:$0xff] %vm641, %v630
        %649 = vst.msk [vmem:[#allocation4 + $0x38] sm:$0xff] %vm641, %v632
        %v650 = vrot.slane %v435, 2
        %v651 = vrot.slane %v436, 2
        %v652 = vsel %vm521, %v650, %v651
        %653 = vrot.lane.b32.xlu0 %v527, 20
        %v654 = vpop.permute.xlu0 %653
        %655 = vrot.lane.b32.xlu0 %v530, 20
        %v656 = vpop.permute.xlu0 %655
        %657 = vrot.lane.b32.xlu0 %v533, 20
        %v658 = vpop.permute.xlu0 %657
        %659 = vrot.lane.b32.xlu0 %v536, 20
        %v660 = vpop.permute.xlu0 %659
        %661 = vrot.lane.b32.xlu0 %v539, 20
        %v662 = vpop.permute.xlu0 %661
        %663 = vrot.lane.b32.xlu0 %v542, 20
        %v664 = vpop.permute.xlu0 %663
        %665 = vrot.lane.b32.xlu0 %v545, 20
        %v666 = vpop.permute.xlu0 %665
        %667 = vrot.lane.b32.xlu0 %v652, 20
        %v668 = vpop.permute.xlu0 %667
        %vm677 = vcmask 195744
        %678 = vst.msk [vmem:[#allocation4] sm:$0xff] %vm677, %v654
        %679 = vst.msk [vmem:[#allocation4 + $0x8] sm:$0xff] %vm677, %v656
        %680 = vst.msk [vmem:[#allocation4 + $0x10] sm:$0xff] %vm677, %v658
        %681 = vst.msk [vmem:[#allocation4 + $0x18] sm:$0xff] %vm677, %v660
        %682 = vst.msk [vmem:[#allocation4 + $0x20] sm:$0xff] %vm677, %v662
        %683 = vst.msk [vmem:[#allocation4 + $0x28] sm:$0xff] %vm677, %v664
        %684 = vst.msk [vmem:[#allocation4 + $0x30] sm:$0xff] %vm677, %v666
        %685 = vst.msk [vmem:[#allocation4 + $0x38] sm:$0xff] %vm677, %v668
        %687 = vrot.lane.b32.xlu0 %v423, 24
        %v688 = vpop.permute.xlu0 %687
        %689 = vrot.lane.b32.xlu0 %v425, 24
        %v690 = vpop.permute.xlu0 %689
        %691 = vrot.lane.b32.xlu0 %v427, 24
        %v692 = vpop.permute.xlu0 %691
        %693 = vrot.lane.b32.xlu0 %v429, 24
        %v694 = vpop.permute.xlu0 %693
        %695 = vrot.lane.b32.xlu0 %v431, 24
        %v696 = vpop.permute.xlu0 %695
        %697 = vrot.lane.b32.xlu0 %v433, 24
        %v698 = vpop.permute.xlu0 %697
        %699 = vrot.lane.b32.xlu0 %v435, 24
        %v700 = vpop.permute.xlu0 %699
        %701 = vrot.lane.b32.xlu0 %v437, 24
        %v702 = vpop.permute.xlu0 %701
        %vm711 = vcmask 228544
        %712 = vst.msk [vmem:[#allocation4] sm:$0xff] %vm711, %v688
        %713 = vst.msk [vmem:[#allocation4 + $0x8] sm:$0xff] %vm711, %v690
        %714 = vst.msk [vmem:[#allocation4 + $0x10] sm:$0xff] %vm711, %v692
        %715 = vst.msk [vmem:[#allocation4 + $0x18] sm:$0xff] %vm711, %v694
        %716 = vst.msk [vmem:[#allocation4 + $0x20] sm:$0xff] %vm711, %v696
        %717 = vst.msk [vmem:[#allocation4 + $0x28] sm:$0xff] %vm711, %v698
        %718 = vst.msk [vmem:[#allocation4 + $0x30] sm:$0xff] %vm711, %v700
        %719 = vst.msk [vmem:[#allocation4 + $0x38] sm:$0xff] %vm711, %v702
        %v721 = vrot.slane %v437, 1
        %v722 = vrot.slane %v438, 1
        %v723 = vsel %vm463, %v721, %v722
        %724 = vrot.lane.b32.xlu0 %v472, 28
        %v725 = vpop.permute.xlu0 %724
        %726 = vrot.lane.b32.xlu0 %v475, 28
        %v727 = vpop.permute.xlu0 %726
        %728 = vrot.lane.b32.xlu0 %v478, 28
        %v729 = vpop.permute.xlu0 %728
        %730 = vrot.lane.b32.xlu0 %v481, 28
        %v731 = vpop.permute.xlu0 %730
        %732 = vrot.lane.b32.xlu0 %v484, 28
        %v733 = vpop.permute.xlu0 %732
        %734 = vrot.lane.b32.xlu0 %v487, 28
        %v735 = vpop.permute.xlu0 %734
        %736 = vrot.lane.b32.xlu0 %v616, 28
        %v737 = vpop.permute.xlu0 %736
        %738 = vrot.lane.b32.xlu0 %v723, 28
        %v739 = vpop.permute.xlu0 %738
        %vm748 = vcmask 261344
        %749 = vst.msk [vmem:[#allocation4] sm:$0xff] %vm748, %v725
        %750 = vst.msk [vmem:[#allocation4 + $0x8] sm:$0xff] %vm748, %v727
        %751 = vst.msk [vmem:[#allocation4 + $0x10] sm:$0xff] %vm748, %v729
        %752 = vst.msk [vmem:[#allocation4 + $0x18] sm:$0xff] %vm748, %v731
        %753 = vst.msk [vmem:[#allocation4 + $0x20] sm:$0xff] %vm748, %v733
        %754 = vst.msk [vmem:[#allocation4 + $0x28] sm:$0xff] %vm748, %v735
        %755 = vst.msk [vmem:[#allocation4 + $0x30] sm:$0xff] %vm748, %v737
        %756 = vst.msk [vmem:[#allocation4 + $0x38] sm:$0xff] %vm748, %v739
        %v757 = vrot.slane %v437, 2
        %v758 = vrot.slane %v438, 2
        %v759 = vsel %vm521, %v757, %v758
        %760 = vrot.lane.b32.xlu0 %v530, 32
        %v761 = vpop.permute.xlu0 %760
        %762 = vrot.lane.b32.xlu0 %v533, 32
        %v763 = vpop.permute.xlu0 %762
        %764 = vrot.lane.b32.xlu0 %v536, 32
        %v765 = vpop.permute.xlu0 %764
        %766 = vrot.lane.b32.xlu0 %v539, 32
        %v767 = vpop.permute.xlu0 %766
        %768 = vrot.lane.b32.xlu0 %v542, 32
        %v769 = vpop.permute.xlu0 %768
        %770 = vrot.lane.b32.xlu0 %v545, 32
        %v771 = vpop.permute.xlu0 %770
        %772 = vrot.lane.b32.xlu0 %v652, 32
        %v773 = vpop.permute.xlu0 %772
        %774 = vrot.lane.b32.xlu0 %v759, 32
        %v775 = vpop.permute.xlu0 %774
        %vm784 = vcmask 294144
        %785 = vst.msk [vmem:[#allocation4] sm:$0xff] %vm784, %v761
        %786 = vst.msk [vmem:[#allocation4 + $0x8] sm:$0xff] %vm784, %v763
        %787 = vst.msk [vmem:[#allocation4 + $0x10] sm:$0xff] %vm784, %v765
        %788 = vst.msk [vmem:[#allocation4 + $0x18] sm:$0xff] %vm784, %v767
        %789 = vst.msk [vmem:[#allocation4 + $0x20] sm:$0xff] %vm784, %v769
        %790 = vst.msk [vmem:[#allocation4 + $0x28] sm:$0xff] %vm784, %v771
        %791 = vst.msk [vmem:[#allocation4 + $0x30] sm:$0xff] %vm784, %v773
        %792 = vst.msk [vmem:[#allocation4 + $0x38] sm:$0xff] %vm784, %v775
        %v793 = vld [vmem:[#allocation4] sm:$0xff]
        %v794 = vld [vmem:[#allocation4 + $0x8] sm:$0xff]
        %v795 = vld [vmem:[#allocation4 + $0x10] sm:$0xff]
        %v796 = vld [vmem:[#allocation4 + $0x18] sm:$0xff]
        %v797 = vld [vmem:[#allocation4 + $0x20] sm:$0xff]
        %v798 = vld [vmem:[#allocation4 + $0x28] sm:$0xff]
        %v799 = vld [vmem:[#allocation4 + $0x30] sm:$0xff]
        %v800 = vld [vmem:[#allocation4 + $0x38] sm:$0xff]
        %v801 = vld [vmem:[%s1] sm:$0xff]
        %v802 = vld [vmem:[%s1 + $0x8] sm:$0xff]
        %v803 = vld [vmem:[%s1 + $0x10] sm:$0xff]
        %v804 = vld [vmem:[%s1 + $0x18] sm:$0xff]
        %v805 = vld [vmem:[%s1 + $0x20] sm:$0xf]
        %vm806 = vcmask 293888
        %v808 = vsel %vm806, %v793, 0
        %v811 = vsel %vm806, %v794, 0
        %v814 = vsel %vm806, %v795, 0
        %v817 = vsel %vm806, %v796, 0
        %v820 = vsel %vm806, %v797, 0
        %v823 = vsel %vm806, %v798, 0
        %v826 = vsel %vm806, %v799, 0
        %v829 = vsel %vm806, %v800, 0
        %vm831 = vcmask 1043456
        %v833 = vsel %vm831, %v805, 0
        %835 = vmatprep.subr.mxu0 0.0
        %836 = vmatpush1.msra.mxu0 0.0
        %837 = vmatprep.subr.mxu0 0.0
        %838 = vmatpush1.msra.mxu0 0.0
        %839 = vmatprep.subr.mxu0 0.0
        %840 = vmatpush1.msra.mxu0 0.0
        %841 = vmatprep.subr.mxu0 0.0
        %842 = vmatpush1.msra.mxu0 0.0
        %843 = vmatprep.subr.mxu0 0.0
        %844 = vmatpush1.msra.mxu0 0.0
        %845 = vmatprep.subr.mxu0 0.0
        %846 = vmatpush1.msra.mxu0 0.0
        %847 = vmatprep.subr.mxu0 0.0
        %848 = vmatpush1.msra.mxu0 0.0
        %849 = vmatprep.subr.mxu0 0.0
        %850 = vmatpush1.msra.mxu0 0.0
        %851 = vmatprep.subr.mxu0 0.0
        %852 = vmatpush1.msra.mxu0 0.0
        %853 = vmatprep.subr.mxu0 0.0
        %854 = vmatpush1.msra.mxu0 0.0
        %855 = vmatprep.subr.mxu0 0.0
        %856 = vmatpush1.msra.mxu0 0.0
        %857 = vmatprep.subr.mxu0 0.0
        %858 = vmatpush1.msra.mxu0 %v833
        %859 = vmatprep.subr.mxu0 0.0
        %860 = vmatpush1.msra.mxu0 %v804
        %861 = vmatprep.subr.mxu0 0.0
        %862 = vmatpush1.msra.mxu0 %v803
        %863 = vmatprep.subr.mxu0 0.0
        %864 = vmatpush1.msra.mxu0 %v802
        %865 = vmatprep.subr.mxu0 0.0
        %866 = vmatpush1.msra.mxu0 %v801
        %867 = vmatprep.subr.mxu0 0.0
        %868 = vmatpush2.msra.mxu0 0.0
        %869 = vmatprep.subr.mxu0 0.0
        %870 = vmatpush2.msra.mxu0 0.0
        %871 = vmatprep.subr.mxu0 0.0
        %872 = vmatpush2.msra.mxu0 0.0
        %873 = vmatprep.subr.mxu0 0.0
        %874 = vmatpush2.msra.mxu0 0.0
        %875 = vmatprep.subr.mxu0 0.0
        %876 = vmatpush2.msra.mxu0 0.0
        %877 = vmatprep.subr.mxu0 0.0
        %878 = vmatpush2.msra.mxu0 0.0
        %879 = vmatprep.subr.mxu0 0.0
        %880 = vmatpush2.msra.mxu0 0.0
        %881 = vmatprep.subr.mxu0 0.0
        %882 = vmatpush2.msra.mxu0 0.0
        %883 = vmatprep.subr.mxu0 0.0
        %884 = vmatpush2.msra.mxu0 0.0
        %885 = vmatprep.subr.mxu0 0.0
        %886 = vmatpush2.msra.mxu0 0.0
        %887 = vmatprep.subr.mxu0 0.0
        %888 = vmatpush2.msra.mxu0 0.0
        %889 = vmatprep.subr.mxu0 0.0
        %890 = vmatpush2.msra.mxu0 0.0
        %891 = vmatprep.subr.mxu0 0.0
        %892 = vmatpush2.msra.mxu0 0.0
        %893 = vmatprep.subr.mxu0 0.0
        %894 = vmatpush2.msra.mxu0 0.0
        %895 = vmatprep.subr.mxu0 0.0
        %896 = vmatpush2.msra.mxu0 0.0
        %897 = vmatprep.subr.mxu0 0.0
        %898 = vmatpush2.msra.mxu0 0.0
        %899 = vmatprep.mubr.f32.mxu0 0.0
        %900 = vmatmul.mubr.f32.gmra.mxu0 %v808
        %v901 = vpop.f32.mrf.mxu0
        %v902 = vadd.f32 0.0, %v901
        %v903 = vpop.f32.mrf.mxu0
        %904 = vmatprep.mubr.f32.mxu0 0.0
        %905 = vmatmul.mubr.f32.gmra.mxu0 %v811
        %v906 = vpop.f32.mrf.mxu0
        %v907 = vadd.f32 0.0, %v906
        %v908 = vpop.f32.mrf.mxu0
        %909 = vmatprep.mubr.f32.mxu0 0.0
        %910 = vmatmul.mubr.f32.gmra.mxu0 %v814
        %v911 = vpop.f32.mrf.mxu0
        %v912 = vadd.f32 0.0, %v911
        %v913 = vpop.f32.mrf.mxu0
        %914 = vmatprep.mubr.f32.mxu0 0.0
        %915 = vmatmul.mubr.f32.gmra.mxu0 %v817
        %v916 = vpop.f32.mrf.mxu0
        %v917 = vadd.f32 0.0, %v916
        %v918 = vpop.f32.mrf.mxu0
        %919 = vmatprep.mubr.f32.mxu0 0.0
        %920 = vmatmul.mubr.f32.gmra.mxu0 %v820
        %v921 = vpop.f32.mrf.mxu0
        %v922 = vadd.f32 0.0, %v921
        %v923 = vpop.f32.mrf.mxu0
        %924 = vmatprep.mubr.f32.mxu0 0.0
        %925 = vmatmul.mubr.f32.gmra.mxu0 %v823
        %v926 = vpop.f32.mrf.mxu0
        %v927 = vadd.f32 0.0, %v926
        %v928 = vpop.f32.mrf.mxu0
        %929 = vmatprep.mubr.f32.mxu0 0.0
        %930 = vmatmul.mubr.f32.gmra.mxu0 %v826
        %v931 = vpop.f32.mrf.mxu0
        %v932 = vadd.f32 0.0, %v931
        %v933 = vpop.f32.mrf.mxu0
        %934 = vmatprep.mubr.f32.mxu0 0.0
        %935 = vmatmul.mubr.f32.gmra.mxu0 %v829
        %v936 = vpop.f32.mrf.mxu0
        %v937 = vadd.f32 0.0, %v936
        %v938 = vpop.f32.mrf.mxu0
        %939 = vdwg.mxu0
        %v940 = vld [vmem:[%s2] sm:$0x1]
        %v942 = vlaneseq
        %v943 = vshrl.u32 %v942, 7
        %v944 = vsub.s32 0, %v943
        %v945 = vrot.slane %v940, %v944
        %v947 = vmul.f32 %v902, %v945
        %v948 = vmul.f32 %v907, %v945
        %v949 = vmul.f32 %v912, %v945
        %v950 = vmul.f32 %v917, %v945
        %v951 = vmul.f32 %v922, %v945
        %v952 = vmul.f32 %v927, %v945
        %v953 = vmul.f32 %v932, %v945
        %v954 = vmul.f32 %v937, %v945
        %v955 = vld [vmem:[%s3] sm:$0x1]
        %v957 = vlaneseq
        %v958 = vshrl.u32 %v957, 7
        %v959 = vsub.s32 0, %v958
        %v960 = vrot.slane %v955, %v959
        %v962 = vadd.f32 %v947, %v960
        %v963 = vadd.f32 %v948, %v960
        %v964 = vadd.f32 %v949, %v960
        %v965 = vadd.f32 %v950, %v960
        %v966 = vadd.f32 %v951, %v960
        %v967 = vadd.f32 %v952, %v960
        %v968 = vadd.f32 %v953, %v960
        %v969 = vadd.f32 %v954, %v960
        %v970 = vmax.f32 %v962, 0.0
        %v971 = vmax.f32 %v963, 0.0
        %v972 = vmax.f32 %v964, 0.0
        %v973 = vmax.f32 %v965, 0.0
        %v974 = vmax.f32 %v966, 0.0
        %v975 = vmax.f32 %v967, 0.0
        %v976 = vmax.f32 %v968, 0.0
        %v977 = vmax.f32 %v969, 0.0
        %s978 = scalar_lea.vmem [#allocation3], 16
        %vm979 = vcmask 64512
        %980 = vst.msk [vmem:[%s978 + $0x1] sm:$0xff] %vm979, %v970
        %981 = vst.msk [vmem:[%s978 + $0x11] sm:$0xff] %vm979, %v971
        %982 = vst.msk [vmem:[%s978 + $0x21] sm:$0xff] %vm979, %v972
        %983 = vst.msk [vmem:[%s978 + $0x31] sm:$0xff] %vm979, %v973
        %984 = vst.msk [vmem:[%s978 + $0x41] sm:$0xff] %vm979, %v974
        %985 = vst.msk [vmem:[%s978 + $0x51] sm:$0xff] %vm979, %v975
        %986 = vst.msk [vmem:[%s978 + $0x61] sm:$0xff] %vm979, %v976
        %987 = vst.msk [vmem:[%s978 + $0x71] sm:$0xff] %vm979, %v977
        %v988 = vld [vmem:[#allocation3] sm:$0xff]
        %v989 = vld [vmem:[#allocation3 + $0x8] sm:$0x3]
        %v990 = vld [vmem:[#allocation3 + $0x10] sm:$0xff]
        %v991 = vld [vmem:[#allocation3 + $0x18] sm:$0x3]
        %v992 = vld [vmem:[#allocation3 + $0x20] sm:$0xff]
        %v993 = vld [vmem:[#allocation3 + $0x28] sm:$0x3]
        %v994 = vld [vmem:[#allocation3 + $0x30] sm:$0xff]
        %v995 = vld [vmem:[#allocation3 + $0x38] sm:$0x3]
        %v996 = vld [vmem:[#allocation3 + $0x40] sm:$0xff]
        %v997 = vld [vmem:[#allocation3 + $0x48] sm:$0x3]
        %v998 = vld [vmem:[#allocation3 + $0x50] sm:$0xff]
        %v999 = vld [vmem:[#allocation3 + $0x58] sm:$0x3]
        %v1000 = vld [vmem:[#allocation3 + $0x60] sm:$0xff]
        %v1001 = vld [vmem:[#allocation3 + $0x68] sm:$0x3]
        %v1002 = vld [vmem:[#allocation3 + $0x70] sm:$0xff]
        %v1003 = vld [vmem:[#allocation3 + $0x78] sm:$0x3]
        %v1004 = vld [vmem:[#allocation3 + $0x80] sm:$0xff]
        %v1005 = vld [vmem:[#allocation3 + $0x88] sm:$0x3]
        %v1006 = vld [vmem:[#allocation3 + $0x90] sm:$0xff]
        %v1007 = vld [vmem:[#allocation3 + $0x98] sm:$0x3]
        %1008 = vst.msk [vmem:[#allocation5] sm:$0xff] %vm979, %v988
        %1009 = vst.msk [vmem:[#allocation5 + $0x8] sm:$0xff] %vm979, %v990
        %1010 = vst.msk [vmem:[#allocation5 + $0x10] sm:$0xff] %vm979, %v992
        %1011 = vst.msk [vmem:[#allocation5 + $0x18] sm:$0xff] %vm979, %v994
        %1012 = vst.msk [vmem:[#allocation5 + $0x20] sm:$0xff] %vm979, %v996
        %1013 = vst.msk [vmem:[#allocation5 + $0x28] sm:$0xff] %vm979, %v998
        %1014 = vst.msk [vmem:[#allocation5 + $0x30] sm:$0xff] %vm979, %v1000
        %1015 = vst.msk [vmem:[#allocation5 + $0x38] sm:$0xff] %vm979, %v1002
        %v1032 = vrot.slane %v988, 1
        %v1033 = vrot.slane %v989, 1
        %v1034 = vsel %vm463, %v1032, %v1033
        %v1035 = vrot.slane %v990, 1
        %v1036 = vrot.slane %v991, 1
        %v1037 = vsel %vm463, %v1035, %v1036
        %v1038 = vrot.slane %v992, 1
        %v1039 = vrot.slane %v993, 1
        %v1040 = vsel %vm463, %v1038, %v1039
        %v1041 = vrot.slane %v994, 1
        %v1042 = vrot.slane %v995, 1
        %v1043 = vsel %vm463, %v1041, %v1042
        %v1044 = vrot.slane %v996, 1
        %v1045 = vrot.slane %v997, 1
        %v1046 = vsel %vm463, %v1044, %v1045
        %v1047 = vrot.slane %v998, 1
        %v1048 = vrot.slane %v999, 1
        %v1049 = vsel %vm463, %v1047, %v1048
        %v1050 = vrot.slane %v1000, 1
        %v1051 = vrot.slane %v1001, 1
        %v1052 = vsel %vm463, %v1050, %v1051
        %v1053 = vrot.slane %v1002, 1
        %v1054 = vrot.slane %v1003, 1
        %v1055 = vsel %vm463, %v1053, %v1054
        %1056 = vrot.lane.b32.xlu0 %v1034, 8
        %v1057 = vpop.permute.xlu0 %1056
        %1058 = vrot.lane.b32.xlu0 %v1037, 8
        %v1059 = vpop.permute.xlu0 %1058
        %1060 = vrot.lane.b32.xlu0 %v1040, 8
        %v1061 = vpop.permute.xlu0 %1060
        %1062 = vrot.lane.b32.xlu0 %v1043, 8
        %v1063 = vpop.permute.xlu0 %1062
        %1064 = vrot.lane.b32.xlu0 %v1046, 8
        %v1065 = vpop.permute.xlu0 %1064
        %1066 = vrot.lane.b32.xlu0 %v1049, 8
        %v1067 = vpop.permute.xlu0 %1066
        %1068 = vrot.lane.b32.xlu0 %v1052, 8
        %v1069 = vpop.permute.xlu0 %1068
        %1070 = vrot.lane.b32.xlu0 %v1055, 8
        %v1071 = vpop.permute.xlu0 %1070
        %vm1080 = vcmask 130112
        %1081 = vst.msk [vmem:[#allocation5] sm:$0xff] %vm1080, %v1057
        %1082 = vst.msk [vmem:[#allocation5 + $0x8] sm:$0xff] %vm1080, %v1059
        %1083 = vst.msk [vmem:[#allocation5 + $0x10] sm:$0xff] %vm1080, %v1061
        %1084 = vst.msk [vmem:[#allocation5 + $0x18] sm:$0xff] %vm1080, %v1063
        %1085 = vst.msk [vmem:[#allocation5 + $0x20] sm:$0xff] %vm1080, %v1065
        %1086 = vst.msk [vmem:[#allocation5 + $0x28] sm:$0xff] %vm1080, %v1067
        %1087 = vst.msk [vmem:[#allocation5 + $0x30] sm:$0xff] %vm1080, %v1069
        %1088 = vst.msk [vmem:[#allocation5 + $0x38] sm:$0xff] %vm1080, %v1071
        %v1089 = vrot.slane %v988, 2
        %v1090 = vrot.slane %v989, 2
        %v1091 = vsel %vm521, %v1089, %v1090
        %v1092 = vrot.slane %v990, 2
        %v1093 = vrot.slane %v991, 2
        %v1094 = vsel %vm521, %v1092, %v1093
        %v1095 = vrot.slane %v992, 2
        %v1096 = vrot.slane %v993, 2
        %v1097 = vsel %vm521, %v1095, %v1096
        %v1098 = vrot.slane %v994, 2
        %v1099 = vrot.slane %v995, 2
        %v1100 = vsel %vm521, %v1098, %v1099
        %v1101 = vrot.slane %v996, 2
        %v1102 = vrot.slane %v997, 2
        %v1103 = vsel %vm521, %v1101, %v1102
        %v1104 = vrot.slane %v998, 2
        %v1105 = vrot.slane %v999, 2
        %v1106 = vsel %vm521, %v1104, %v1105
        %v1107 = vrot.slane %v1000, 2
        %v1108 = vrot.slane %v1001, 2
        %v1109 = vsel %vm521, %v1107, %v1108
        %v1110 = vrot.slane %v1002, 2
        %v1111 = vrot.slane %v1003, 2
        %v1112 = vsel %vm521, %v1110, %v1111
        %1113 = vrot.lane.b32.xlu0 %v1091, 16
        %v1114 = vpop.permute.xlu0 %1113
        %1115 = vrot.lane.b32.xlu0 %v1094, 16
        %v1116 = vpop.permute.xlu0 %1115
        %1117 = vrot.lane.b32.xlu0 %v1097, 16
        %v1118 = vpop.permute.xlu0 %1117
        %1119 = vrot.lane.b32.xlu0 %v1100, 16
        %v1120 = vpop.permute.xlu0 %1119
        %1121 = vrot.lane.b32.xlu0 %v1103, 16
        %v1122 = vpop.permute.xlu0 %1121
        %1123 = vrot.lane.b32.xlu0 %v1106, 16
        %v1124 = vpop.permute.xlu0 %1123
        %1125 = vrot.lane.b32.xlu0 %v1109, 16
        %v1126 = vpop.permute.xlu0 %1125
        %1127 = vrot.lane.b32.xlu0 %v1112, 16
        %v1128 = vpop.permute.xlu0 %1127
        %vm1137 = vcmask 195712
        %1138 = vst.msk [vmem:[#allocation5] sm:$0xff] %vm1137, %v1114
        %1139 = vst.msk [vmem:[#allocation5 + $0x8] sm:$0xff] %vm1137, %v1116
        %1140 = vst.msk [vmem:[#allocation5 + $0x10] sm:$0xff] %vm1137, %v1118
        %1141 = vst.msk [vmem:[#allocation5 + $0x18] sm:$0xff] %vm1137, %v1120
        %1142 = vst.msk [vmem:[#allocation5 + $0x20] sm:$0xff] %vm1137, %v1122
        %1143 = vst.msk [vmem:[#allocation5 + $0x28] sm:$0xff] %vm1137, %v1124
        %1144 = vst.msk [vmem:[#allocation5 + $0x30] sm:$0xff] %vm1137, %v1126
        %1145 = vst.msk [vmem:[#allocation5 + $0x38] sm:$0xff] %vm1137, %v1128
        %1147 = vrot.lane.b32.xlu0 %v990, 24
        %v1148 = vpop.permute.xlu0 %1147
        %1149 = vrot.lane.b32.xlu0 %v992, 24
        %v1150 = vpop.permute.xlu0 %1149
        %1151 = vrot.lane.b32.xlu0 %v994, 24
        %v1152 = vpop.permute.xlu0 %1151
        %1153 = vrot.lane.b32.xlu0 %v996, 24
        %v1154 = vpop.permute.xlu0 %1153
        %1155 = vrot.lane.b32.xlu0 %v998, 24
        %v1156 = vpop.permute.xlu0 %1155
        %1157 = vrot.lane.b32.xlu0 %v1000, 24
        %v1158 = vpop.permute.xlu0 %1157
        %1159 = vrot.lane.b32.xlu0 %v1002, 24
        %v1160 = vpop.permute.xlu0 %1159
        %1161 = vrot.lane.b32.xlu0 %v1004, 24
        %v1162 = vpop.permute.xlu0 %1161
        %vm1171 = vcmask 261312
        %1172 = vst.msk [vmem:[#allocation5] sm:$0xff] %vm1171, %v1148
        %1173 = vst.msk [vmem:[#allocation5 + $0x8] sm:$0xff] %vm1171, %v1150
        %1174 = vst.msk [vmem:[#allocation5 + $0x10] sm:$0xff] %vm1171, %v1152
        %1175 = vst.msk [vmem:[#allocation5 + $0x18] sm:$0xff] %vm1171, %v1154
        %1176 = vst.msk [vmem:[#allocation5 + $0x20] sm:$0xff] %vm1171, %v1156
        %1177 = vst.msk [vmem:[#allocation5 + $0x28] sm:$0xff] %vm1171, %v1158
        %1178 = vst.msk [vmem:[#allocation5 + $0x30] sm:$0xff] %vm1171, %v1160
        %1179 = vst.msk [vmem:[#allocation5 + $0x38] sm:$0xff] %vm1171, %v1162
        %v1181 = vrot.slane %v1004, 1
        %v1182 = vrot.slane %v1005, 1
        %v1183 = vsel %vm463, %v1181, %v1182
        %1184 = vrot.lane.b32.xlu0 %v1037, 32
        %v1185 = vpop.permute.xlu0 %1184
        %1186 = vrot.lane.b32.xlu0 %v1040, 32
        %v1187 = vpop.permute.xlu0 %1186
        %1188 = vrot.lane.b32.xlu0 %v1043, 32
        %v1189 = vpop.permute.xlu0 %1188
        %1190 = vrot.lane.b32.xlu0 %v1046, 32
        %v1191 = vpop.permute.xlu0 %1190
        %1192 = vrot.lane.b32.xlu0 %v1049, 32
        %v1193 = vpop.permute.xlu0 %1192
        %1194 = vrot.lane.b32.xlu0 %v1052, 32
        %v1195 = vpop.permute.xlu0 %1194
        %1196 = vrot.lane.b32.xlu0 %v1055, 32
        %v1197 = vpop.permute.xlu0 %1196
        %1198 = vrot.lane.b32.xlu0 %v1183, 32
        %v1199 = vpop.permute.xlu0 %1198
        %vm1208 = vcmask 326912
        %1209 = vst.msk [vmem:[#allocation5] sm:$0xff] %vm1208, %v1185
        %1210 = vst.msk [vmem:[#allocation5 + $0x8] sm:$0xff] %vm1208, %v1187
        %1211 = vst.msk [vmem:[#allocation5 + $0x10] sm:$0xff] %vm1208, %v1189
        %1212 = vst.msk [vmem:[#allocation5 + $0x18] sm:$0xff] %vm1208, %v1191
        %1213 = vst.msk [vmem:[#allocation5 + $0x20] sm:$0xff] %vm1208, %v1193
        %1214 = vst.msk [vmem:[#allocation5 + $0x28] sm:$0xff] %vm1208, %v1195
        %1215 = vst.msk [vmem:[#allocation5 + $0x30] sm:$0xff] %vm1208, %v1197
        %1216 = vst.msk [vmem:[#allocation5 + $0x38] sm:$0xff] %vm1208, %v1199
        %v1217 = vrot.slane %v1004, 2
        %v1218 = vrot.slane %v1005, 2
        %v1219 = vsel %vm521, %v1217, %v1218
        %1220 = vrot.lane.b32.xlu0 %v1094, 40
        %v1221 = vpop.permute.xlu0 %1220
        %1222 = vrot.lane.b32.xlu0 %v1097, 40
        %v1223 = vpop.permute.xlu0 %1222
        %1224 = vrot.lane.b32.xlu0 %v1100, 40
        %v1225 = vpop.permute.xlu0 %1224
        %1226 = vrot.lane.b32.xlu0 %v1103, 40
        %v1227 = vpop.permute.xlu0 %1226
        %1228 = vrot.lane.b32.xlu0 %v1106, 40
        %v1229 = vpop.permute.xlu0 %1228
        %1230 = vrot.lane.b32.xlu0 %v1109, 40
        %v1231 = vpop.permute.xlu0 %1230
        %1232 = vrot.lane.b32.xlu0 %v1112, 40
        %v1233 = vpop.permute.xlu0 %1232
        %1234 = vrot.lane.b32.xlu0 %v1219, 40
        %v1235 = vpop.permute.xlu0 %1234
        %vm1244 = vcmask 392512
        %1245 = vst.msk [vmem:[#allocation5] sm:$0xff] %vm1244, %v1221
        %1246 = vst.msk [vmem:[#allocation5 + $0x8] sm:$0xff] %vm1244, %v1223
        %1247 = vst.msk [vmem:[#allocation5 + $0x10] sm:$0xff] %vm1244, %v1225
        %1248 = vst.msk [vmem:[#allocation5 + $0x18] sm:$0xff] %vm1244, %v1227
        %1249 = vst.msk [vmem:[#allocation5 + $0x20] sm:$0xff] %vm1244, %v1229
        %1250 = vst.msk [vmem:[#allocation5 + $0x28] sm:$0xff] %vm1244, %v1231
        %1251 = vst.msk [vmem:[#allocation5 + $0x30] sm:$0xff] %vm1244, %v1233
        %1252 = vst.msk [vmem:[#allocation5 + $0x38] sm:$0xff] %vm1244, %v1235
        %1254 = vrot.lane.b32.xlu0 %v992, 48
        %v1255 = vpop.permute.xlu0 %1254
        %1256 = vrot.lane.b32.xlu0 %v994, 48
        %v1257 = vpop.permute.xlu0 %1256
        %1258 = vrot.lane.b32.xlu0 %v996, 48
        %v1259 = vpop.permute.xlu0 %1258
        %1260 = vrot.lane.b32.xlu0 %v998, 48
        %v1261 = vpop.permute.xlu0 %1260
        %1262 = vrot.lane.b32.xlu0 %v1000, 48
        %v1263 = vpop.permute.xlu0 %1262
        %1264 = vrot.lane.b32.xlu0 %v1002, 48
        %v1265 = vpop.permute.xlu0 %1264
        %1266 = vrot.lane.b32.xlu0 %v1004, 48
        %v1267 = vpop.permute.xlu0 %1266
        %1268 = vrot.lane.b32.xlu0 %v1006, 48
        %v1269 = vpop.permute.xlu0 %1268
        %vm1278 = vcmask 458112
        %1279 = vst.msk [vmem:[#allocation5] sm:$0xff] %vm1278, %v1255
        %1280 = vst.msk [vmem:[#allocation5 + $0x8] sm:$0xff] %vm1278, %v1257
        %1281 = vst.msk [vmem:[#allocation5 + $0x10] sm:$0xff] %vm1278, %v1259
        %1282 = vst.msk [vmem:[#allocation5 + $0x18] sm:$0xff] %vm1278, %v1261
        %1283 = vst.msk [vmem:[#allocation5 + $0x20] sm:$0xff] %vm1278, %v1263
        %1284 = vst.msk [vmem:[#allocation5 + $0x28] sm:$0xff] %vm1278, %v1265
        %1285 = vst.msk [vmem:[#allocation5 + $0x30] sm:$0xff] %vm1278, %v1267
        %1286 = vst.msk [vmem:[#allocation5 + $0x38] sm:$0xff] %vm1278, %v1269
        %v1288 = vrot.slane %v1006, 1
        %v1289 = vrot.slane %v1007, 1
        %v1290 = vsel %vm463, %v1288, %v1289
        %1291 = vrot.lane.b32.xlu0 %v1040, 56
        %v1292 = vpop.permute.xlu0 %1291
        %1293 = vrot.lane.b32.xlu0 %v1043, 56
        %v1294 = vpop.permute.xlu0 %1293
        %1295 = vrot.lane.b32.xlu0 %v1046, 56
        %v1296 = vpop.permute.xlu0 %1295
        %1297 = vrot.lane.b32.xlu0 %v1049, 56
        %v1298 = vpop.permute.xlu0 %1297
        %1299 = vrot.lane.b32.xlu0 %v1052, 56
        %v1300 = vpop.permute.xlu0 %1299
        %1301 = vrot.lane.b32.xlu0 %v1055, 56
        %v1302 = vpop.permute.xlu0 %1301
        %1303 = vrot.lane.b32.xlu0 %v1183, 56
        %v1304 = vpop.permute.xlu0 %1303
        %1305 = vrot.lane.b32.xlu0 %v1290, 56
        %v1306 = vpop.permute.xlu0 %1305
        %vm1315 = vcmask 523712
        %1316 = vst.msk [vmem:[#allocation5] sm:$0xff] %vm1315, %v1292
        %1317 = vst.msk [vmem:[#allocation5 + $0x8] sm:$0xff] %vm1315, %v1294
        %1318 = vst.msk [vmem:[#allocation5 + $0x10] sm:$0xff] %vm1315, %v1296
        %1319 = vst.msk [vmem:[#allocation5 + $0x18] sm:$0xff] %vm1315, %v1298
        %1320 = vst.msk [vmem:[#allocation5 + $0x20] sm:$0xff] %vm1315, %v1300
        %1321 = vst.msk [vmem:[#allocation5 + $0x28] sm:$0xff] %vm1315, %v1302
        %1322 = vst.msk [vmem:[#allocation5 + $0x30] sm:$0xff] %vm1315, %v1304
        %1323 = vst.msk [vmem:[#allocation5 + $0x38] sm:$0xff] %vm1315, %v1306
        %v1324 = vrot.slane %v1006, 2
        %v1325 = vrot.slane %v1007, 2
        %v1326 = vsel %vm521, %v1324, %v1325
        %1327 = vrot.lane.b32.xlu0 %v1097, 64
        %v1328 = vpop.permute.xlu0 %1327
        %1329 = vrot.lane.b32.xlu0 %v1100, 64
        %v1330 = vpop.permute.xlu0 %1329
        %1331 = vrot.lane.b32.xlu0 %v1103, 64
        %v1332 = vpop.permute.xlu0 %1331
        %1333 = vrot.lane.b32.xlu0 %v1106, 64
        %v1334 = vpop.permute.xlu0 %1333
        %1335 = vrot.lane.b32.xlu0 %v1109, 64
        %v1336 = vpop.permute.xlu0 %1335
        %1337 = vrot.lane.b32.xlu0 %v1112, 64
        %v1338 = vpop.permute.xlu0 %1337
        %1339 = vrot.lane.b32.xlu0 %v1219, 64
        %v1340 = vpop.permute.xlu0 %1339
        %1341 = vrot.lane.b32.xlu0 %v1326, 64
        %v1342 = vpop.permute.xlu0 %1341
        %vm1351 = vcmask 589312
        %1352 = vst.msk [vmem:[#allocation5] sm:$0xff] %vm1351, %v1328
        %1353 = vst.msk [vmem:[#allocation5 + $0x8] sm:$0xff] %vm1351, %v1330
        %1354 = vst.msk [vmem:[#allocation5 + $0x10] sm:$0xff] %vm1351, %v1332
        %1355 = vst.msk [vmem:[#allocation5 + $0x18] sm:$0xff] %vm1351, %v1334
        %1356 = vst.msk [vmem:[#allocation5 + $0x20] sm:$0xff] %vm1351, %v1336
        %1357 = vst.msk [vmem:[#allocation5 + $0x28] sm:$0xff] %vm1351, %v1338
        %1358 = vst.msk [vmem:[#allocation5 + $0x30] sm:$0xff] %vm1351, %v1340
        %1359 = vst.msk [vmem:[#allocation5 + $0x38] sm:$0xff] %vm1351, %v1342
        %v1360 = vld [vmem:[#allocation5] sm:$0xff]
        %v1361 = vld [vmem:[#allocation5 + $0x8] sm:$0xff]
        %v1362 = vld [vmem:[#allocation5 + $0x10] sm:$0xff]
        %v1363 = vld [vmem:[#allocation5 + $0x18] sm:$0xff]
        %v1364 = vld [vmem:[#allocation5 + $0x20] sm:$0xff]
        %v1365 = vld [vmem:[#allocation5 + $0x28] sm:$0xff]
        %v1366 = vld [vmem:[#allocation5 + $0x30] sm:$0xff]
        %v1367 = vld [vmem:[#allocation5 + $0x38] sm:$0xff]
        %v1368 = vld [vmem:[%s4] sm:$0xff]
        %v1369 = vld [vmem:[%s4 + $0x8] sm:$0xff]
        %v1370 = vld [vmem:[%s4 + $0x10] sm:$0xff]
        %v1371 = vld [vmem:[%s4 + $0x18] sm:$0xff]
        %v1372 = vld [vmem:[%s4 + $0x20] sm:$0xff]
        %v1373 = vld [vmem:[%s4 + $0x28] sm:$0xff]
        %v1374 = vld [vmem:[%s4 + $0x30] sm:$0xff]
        %v1375 = vld [vmem:[%s4 + $0x38] sm:$0xff]
        %v1376 = vld [vmem:[%s4 + $0x40] sm:$0xff]
        %vm1377 = vcmask 588800
        %v1379 = vsel %vm1377, %v1360, 0
        %v1382 = vsel %vm1377, %v1361, 0
        %v1385 = vsel %vm1377, %v1362, 0
        %v1388 = vsel %vm1377, %v1363, 0
        %v1391 = vsel %vm1377, %v1364, 0
        %v1394 = vsel %vm1377, %v1365, 0
        %v1397 = vsel %vm1377, %v1366, 0
        %v1400 = vsel %vm1377, %v1367, 0
        %1402 = vmatprep.subr.mxu0 0.0
        %1403 = vmatpush1.msra.mxu0 0.0
        %1404 = vmatprep.subr.mxu0 0.0
        %1405 = vmatpush1.msra.mxu0 0.0
        %1406 = vmatprep.subr.mxu0 0.0
        %1407 = vmatpush1.msra.mxu0 0.0
        %1408 = vmatprep.subr.mxu0 0.0
        %1409 = vmatpush1.msra.mxu0 0.0
        %1410 = vmatprep.subr.mxu0 0.0
        %1411 = vmatpush1.msra.mxu0 0.0
        %1412 = vmatprep.subr.mxu0 0.0
        %1413 = vmatpush1.msra.mxu0 0.0
        %1414 = vmatprep.subr.mxu0 0.0
        %1415 = vmatpush1.msra.mxu0 0.0
        %1416 = vmatprep.subr.mxu0 0.0
        %1417 = vmatpush1.msra.mxu0 %v1376
        %1418 = vmatprep.subr.mxu0 0.0
        %1419 = vmatpush1.msra.mxu0 %v1375
        %1420 = vmatprep.subr.mxu0 0.0
        %1421 = vmatpush1.msra.mxu0 %v1374
        %1422 = vmatprep.subr.mxu0 0.0
        %1423 = vmatpush1.msra.mxu0 %v1373
        %1424 = vmatprep.subr.mxu0 0.0
        %1425 = vmatpush1.msra.mxu0 %v1372
        %1426 = vmatprep.subr.mxu0 0.0
        %1427 = vmatpush1.msra.mxu0 %v1371
        %1428 = vmatprep.subr.mxu0 0.0
        %1429 = vmatpush1.msra.mxu0 %v1370
        %1430 = vmatprep.subr.mxu0 0.0
        %1431 = vmatpush1.msra.mxu0 %v1369
        %1432 = vmatprep.subr.mxu0 0.0
        %1433 = vmatpush1.msra.mxu0 %v1368
        %1434 = vmatprep.subr.mxu0 0.0
        %1435 = vmatpush2.msra.mxu0 0.0
        %1436 = vmatprep.subr.mxu0 0.0
        %1437 = vmatpush2.msra.mxu0 0.0
        %1438 = vmatprep.subr.mxu0 0.0
        %1439 = vmatpush2.msra.mxu0 0.0
        %1440 = vmatprep.subr.mxu0 0.0
        %1441 = vmatpush2.msra.mxu0 0.0
        %1442 = vmatprep.subr.mxu0 0.0
        %1443 = vmatpush2.msra.mxu0 0.0
        %1444 = vmatprep.subr.mxu0 0.0
        %1445 = vmatpush2.msra.mxu0 0.0
        %1446 = vmatprep.subr.mxu0 0.0
        %1447 = vmatpush2.msra.mxu0 0.0
        %1448 = vmatprep.subr.mxu0 0.0
        %1449 = vmatpush2.msra.mxu0 0.0
        %1450 = vmatprep.subr.mxu0 0.0
        %1451 = vmatpush2.msra.mxu0 0.0
        %1452 = vmatprep.subr.mxu0 0.0
        %1453 = vmatpush2.msra.mxu0 0.0
        %1454 = vmatprep.subr.mxu0 0.0
        %1455 = vmatpush2.msra.mxu0 0.0
        %1456 = vmatprep.subr.mxu0 0.0
        %1457 = vmatpush2.msra.mxu0 0.0
        %1458 = vmatprep.subr.mxu0 0.0
        %1459 = vmatpush2.msra.mxu0 0.0
        %1460 = vmatprep.subr.mxu0 0.0
        %1461 = vmatpush2.msra.mxu0 0.0
        %1462 = vmatprep.subr.mxu0 0.0
        %1463 = vmatpush2.msra.mxu0 0.0
        %1464 = vmatprep.subr.mxu0 0.0
        %1465 = vmatpush2.msra.mxu0 0.0
        %1466 = vmatprep.mubr.f32.mxu0 0.0
        %1467 = vmatmul.mubr.f32.gmra.mxu0 %v1379
        %v1468 = vpop.f32.mrf.mxu0
        %v1469 = vadd.f32 0.0, %v1468
        %v1470 = vpop.f32.mrf.mxu0
        %1471 = vmatprep.mubr.f32.mxu0 0.0
        %1472 = vmatmul.mubr.f32.gmra.mxu0 %v1382
        %v1473 = vpop.f32.mrf.mxu0
        %v1474 = vadd.f32 0.0, %v1473
        %v1475 = vpop.f32.mrf.mxu0
        %1476 = vmatprep.mubr.f32.mxu0 0.0
        %1477 = vmatmul.mubr.f32.gmra.mxu0 %v1385
        %v1478 = vpop.f32.mrf.mxu0
        %v1479 = vadd.f32 0.0, %v1478
        %v1480 = vpop.f32.mrf.mxu0
        %1481 = vmatprep.mubr.f32.mxu0 0.0
        %1482 = vmatmul.mubr.f32.gmra.mxu0 %v1388
        %v1483 = vpop.f32.mrf.mxu0
        %v1484 = vadd.f32 0.0, %v1483
        %v1485 = vpop.f32.mrf.mxu0
        %1486 = vmatprep.mubr.f32.mxu0 0.0
        %1487 = vmatmul.mubr.f32.gmra.mxu0 %v1391
        %v1488 = vpop.f32.mrf.mxu0
        %v1489 = vadd.f32 0.0, %v1488
        %v1490 = vpop.f32.mrf.mxu0
        %1491 = vmatprep.mubr.f32.mxu0 0.0
        %1492 = vmatmul.mubr.f32.gmra.mxu0 %v1394
        %v1493 = vpop.f32.mrf.mxu0
        %v1494 = vadd.f32 0.0, %v1493
        %v1495 = vpop.f32.mrf.mxu0
        %1496 = vmatprep.mubr.f32.mxu0 0.0
        %1497 = vmatmul.mubr.f32.gmra.mxu0 %v1397
        %v1498 = vpop.f32.mrf.mxu0
        %v1499 = vadd.f32 0.0, %v1498
        %v1500 = vpop.f32.mrf.mxu0
        %1501 = vmatprep.mubr.f32.mxu0 0.0
        %1502 = vmatmul.mubr.f32.gmra.mxu0 %v1400
        %v1503 = vpop.f32.mrf.mxu0
        %v1504 = vadd.f32 0.0, %v1503
        %v1505 = vpop.f32.mrf.mxu0
        %1506 = vdwg.mxu0
        %v1507 = vld [vmem:[%s5] sm:$0x1]
        %v1509 = vlaneseq
        %v1510 = vshrl.u32 %v1509, 7
        %v1511 = vsub.s32 0, %v1510
        %v1512 = vrot.slane %v1507, %v1511
        %v1514 = vmul.f32 %v1469, %v1512
        %v1515 = vmul.f32 %v1474, %v1512
        %v1516 = vmul.f32 %v1479, %v1512
        %v1517 = vmul.f32 %v1484, %v1512
        %v1518 = vmul.f32 %v1489, %v1512
        %v1519 = vmul.f32 %v1494, %v1512
        %v1520 = vmul.f32 %v1499, %v1512
        %v1521 = vmul.f32 %v1504, %v1512
        %v1522 = vld [vmem:[%s6] sm:$0x1]
        %v1524 = vlaneseq
        %v1525 = vshrl.u32 %v1524, 7
        %v1526 = vsub.s32 0, %v1525
        %v1527 = vrot.slane %v1522, %v1526
        %v1529 = vadd.f32 %v1514, %v1527
        %v1530 = vadd.f32 %v1515, %v1527
        %v1531 = vadd.f32 %v1516, %v1527
        %v1532 = vadd.f32 %v1517, %v1527
        %v1533 = vadd.f32 %v1518, %v1527
        %v1534 = vadd.f32 %v1519, %v1527
        %v1535 = vadd.f32 %v1520, %v1527
        %v1536 = vadd.f32 %v1521, %v1527
        %v1537 = vmax.f32 %v1529, 0.0
        %v1538 = vmax.f32 %v1530, 0.0
        %v1539 = vmax.f32 %v1531, 0.0
        %v1540 = vmax.f32 %v1532, 0.0
        %v1541 = vmax.f32 %v1533, 0.0
        %v1542 = vmax.f32 %v1534, 0.0
        %v1543 = vmax.f32 %v1535, 0.0
        %v1544 = vmax.f32 %v1536, 0.0
        %1545 = vst.msk [vmem:[%s296] sm:$0xff] %vm979, %v1537
        %1546 = vst.msk [vmem:[%s296 + $0x8] sm:$0xff] %vm979, %v1538
        %1547 = vst.msk [vmem:[%s296 + $0x10] sm:$0xff] %vm979, %v1539
        %1548 = vst.msk [vmem:[%s296 + $0x18] sm:$0xff] %vm979, %v1540
        %1549 = vst.msk [vmem:[%s296 + $0x20] sm:$0xff] %vm979, %v1541
        %1550 = vst.msk [vmem:[%s296 + $0x28] sm:$0xff] %vm979, %v1542
        %1551 = vst.msk [vmem:[%s296 + $0x30] sm:$0xff] %vm979, %v1543
        %1552 = vst.msk [vmem:[%s296 + $0x38] sm:$0xff] %vm979, %v1544
        %s1553 = sand.u32 %s184, 1
        %s1554 = scalar_lea.sflag [#allocation8], %s1553
        %s1555 = sand.u32 %s184, 1
        %s1556 = smul.addr %s1555, 64
        %s1557 = scalar_lea.vmem [#allocation9], %s1556
        // Predicated region
        $region57: #{tpu_custom_call.1} parent=47 // pred_check
          %p1558 = pneg %p194
        $region58: #{tpu_custom_call.1} parent=47 // pred_check_branch
          %1560 = sbr.rel (%p1558) target = $region60
        $region59: #{tpu_custom_call.1} parent=47 // pred_region
          %s1562 = ssub.s32 1024, 1024
          %1563 = vsyncadd %s1554, %s1562
          %s1564 = smul.addr %s24, 8
          %s1565 = smul.addr %s1564, 128
          %s1566 = scalar_lea.hbm %s7, %s1565
          %s1567 = sshll.u32 %s1557, 4
          %s1568 = int_to_ptr.vmem [resolvable:$true] %s1567
          %1573 = dma.vmem_to_hbm [thread:$0]  %s1568, 1024, %s1566, %s1554, 128, 128, 8
        $region60: #{tpu_custom_call.1} parent=47 // pred_fallthru
          _
      $region48: #{tpu_custom_call.1} parent=5 // pred_fallthru
        _
      %p1574 = scmp.le.s32.totalorder 2, %s19
      // Predicated region
      $region61: #{tpu_custom_call.1} parent=5 // pred_check
        %p1575 = pneg %p1574
      $region62: #{tpu_custom_call.1} parent=5 // pred_check_branch
        %1577 = sbr.rel (%p1575) target = $region64
      $region63: #{tpu_custom_call.1} parent=5 // pred_region
        %s1578 = ssub.s32 %s19, 2
        // Predicated region
        $region65: #{tpu_custom_call.1} parent=63 // pred_check
          %p1579 = pneg %p200
        $region66: #{tpu_custom_call.1} parent=63 // pred_check_branch
          %1581 = sbr.rel (%p1579) target = $region68
        $region67: #{tpu_custom_call.1} parent=63 // pred_region
          %s1582 = sand.u32 %s185, 1
          %s1583 = scalar_lea.sflag [#allocation8], %s1582
          %s1584 = sand.u32 %s185, 1
          %s1585 = smul.addr %s1584, 64
          %s1586 = scalar_lea.vmem [#allocation9], %s1585
          %1587 = dma.done %s1583, 1024
        $region68: #{tpu_custom_call.1} parent=63 // pred_fallthru
          _
      $region64: #{tpu_custom_call.1} parent=5 // pred_fallthru
        _
    $region6: #{tpu_custom_call.1} parent=1 // loop_footer
      %s23 = sadd.s32 1, %s19
    $region7: #{tpu_custom_call.1} parent=1 // loop_footer_branch
      %18 = sbr.rel target = $region3
    $region8: #{tpu_custom_call.1} parent=1 // loop_exit
      _
    %1588 = vsyncpa [#allocation7], 1
    %s1589 = scalar_lea.sflag [#allocation7], 1
    %1590 = vsyncpa %s1589, 1
    %1591 = vsyncpa [#allocation8], 1
    %s1592 = scalar_lea.sflag [#allocation8], 1
    %1593 = vsyncpa %s1592, 1

</llo_original>
